<compile_context>
chip_gen: v5e
topology: v5e:2x2
jax: 0.10.0
libtpu: 0.0.40
codegen_flags: <defaults>
</compile_context>

<pallas_src>
import functools

import jax
import jax.numpy as jnp
from jax import lax
from jax.experimental import pallas as pl
from jax.experimental.pallas import tpu as pltpu


def _caps_routing_kernel(x_ref, w_ref, o_ref, xhat_ref, *, routing_iterations):
    # x_ref   : (B, Din, P)        class-invariant, resident in VMEM (P on lanes)
    # w_ref   : (CB, Din, Dout, P) this step's class block of prediction weights
    # o_ref   : (CB, B, Dout)      this step's activated output capsules
    # xhat_ref: (B, Dout, P)       VMEM scratch, reused for every class in the block
    x = x_ref[...].astype(jnp.float32)                        # (B, Din, P)
    B, Din, P = x.shape
    CB, _, Dout, _ = w_ref.shape
    inv_p = 1.0 / float(P)

    for cc in range(CB):                                      # static unroll over class block
        w = w_ref[cc].astype(jnp.float32)                     # (Din, Dout, P)

        # --- capsule predictions: x_hat[b,e,p] = sum_d x[b,d,p] * W[d,e,p] ---
        # Din=8 is far below MXU native width; an unrolled lane-dense VPU MAC
        # (P on lanes) is the right shape for this contraction.
        xh = x[:, 0, :][:, None, :] * w[0][None, :, :]
        for d in range(1, Din):
            xh = xh + x[:, d, :][:, None, :] * w[d][None, :, :]
        xhat_ref[...] = xh                                    # single store ...
        x_hat = xhat_ref[...]                                 # ... streamed reads below

        # --- dynamic routing (fully unrolled; exact f32 math) ---
        # iteration 0: b_log == 0 everywhere -> softmax is uniform 1/P
        s = jnp.sum(x_hat, axis=-1) * inv_p                   # (B, Dout)
        sn = jnp.sum(s * s, axis=-1, keepdims=True)           # (B, 1)
        v = s * sn / (1.0 + sn) / jnp.sqrt(sn)                # squash
        b_log = None
        if routing_iterations > 1:
            # agreement a[b,p] = sum_e x_hat[b,e,p] * v[b,e]  (b_log starts at 0)
            b_log = jnp.sum(x_hat * v[:, :, None], axis=1)    # (B, P)

        for it in range(1, routing_iterations):
            # softmax over the primary-capsule axis P (lane axis)
            m = jnp.max(b_log, axis=-1, keepdims=True)
            e = jnp.exp(b_log - m)
            c = e / jnp.sum(e, axis=-1, keepdims=True)        # (B, P)
            s = jnp.sum(c[:, None, :] * x_hat, axis=-1)       # (B, Dout)
            sn = jnp.sum(s * s, axis=-1, keepdims=True)
            v = s * sn / (1.0 + sn) / jnp.sqrt(sn)
            if it < routing_iterations - 1:
                b_log = b_log + jnp.sum(x_hat * v[:, :, None], axis=1)

        # --- fused activation: leaky_relu(v, 0.05) - relu(v - 1) * 0.95 ---
        act = jnp.where(v >= 0.0, v, 0.05 * v) - jnp.maximum(v - 1.0, 0.0) * 0.95
        o_ref[cc] = act.astype(o_ref.dtype)


@functools.partial(jax.jit, static_argnames=("routing_iterations", "classes_per_block"))
def classifier_caps_forward(x, W, routing_iterations=3, classes_per_block=2):
    """x: (B, P, Din); W: (C, P, Din, Dout)  ->  (B, C, Dout)."""
    B, P, Din = x.shape
    C, Pw, Dw, Dout = W.shape
    assert (P, Din) == (Pw, Dw), "x / W capsule dims mismatch"

    cb = classes_per_block if (C % classes_per_block == 0) else 1
    num_blocks = C // cb

    # One-time XLA re-layout so P (a multiple of 128 at real sizes) sits on the
    # lane axis inside the kernel.
    x_t = jnp.transpose(x, (0, 2, 1))                          # (B, Din, P)
    w_t = jnp.transpose(W, (0, 2, 3, 1))                       # (C, Din, Dout, P)

    kernel = functools.partial(_caps_routing_kernel,
                               routing_iterations=routing_iterations)

    grid_spec = pltpu.PrefetchScalarGridSpec(
        num_scalar_prefetch=0,
        grid=(num_blocks,),
        in_specs=[
            # x: same block every step -> fetched once, stays resident in VMEM.
            pl.BlockSpec((B, Din, P), lambda g: (0, 0, 0)),
            # W: one class block per step; the grid pipeline double-buffers it,
            # prefetching block g+1's weights under block g's routing math.
            pl.BlockSpec((cb, Din, Dout, P), lambda g: (g, 0, 0, 0)),
        ],
        out_specs=pl.BlockSpec((cb, B, Dout), lambda g: (g, 0, 0)),
        scratch_shapes=[pltpu.VMEM((B, Dout, P), jnp.float32)],
    )

    out_cbd = pl.pallas_call(
        kernel,
        out_shape=jax.ShapeDtypeStruct((C, B, Dout), jnp.float32),
        grid_spec=grid_spec,
        compiler_params=pltpu.CompilerParams(
            # class blocks are independent -> megacore-shardable (>=2 steps on v7x)
            dimension_semantics=("parallel",),
        ),
    )(x_t, w_t)

    # torch: v_j.swapaxes(0, 1).squeeze()  (here B, C, Dout are all > 1)
    return jnp.transpose(out_cbd, (1, 0, 2))


def classifier_caps_reference(x, W, routing_iterations=3):
    """Pure-JAX direct translation of the torch module (for verification)."""
    C, P, Din, Dout = W.shape
    B = x.shape[0]
    x_hat = jnp.einsum("bpd,cpde->cbpe", x, W,
                       precision=lax.Precision.HIGHEST)[:, :, :, None, :]  # (C,B,P,1,Dout)
    b = jnp.zeros_like(x_hat)
    v = None
    for it in range(routing_iterations):
        c = jax.nn.softmax(b, axis=2)
        s = jnp.sum(c * x_hat, axis=2, keepdims=True)            # (C,B,1,1,Dout)
        sn = jnp.sum(s * s, axis=-1, keepdims=True)
        v = s * sn / (1.0 + sn) / jnp.sqrt(sn)
        if it < routing_iterations - 1:
            b = b + jnp.sum(x_hat * v, axis=-1, keepdims=True)
    v = jnp.swapaxes(v, 0, 1).reshape(B, C, Dout)
    return jnp.where(v >= 0.0, v, 0.05 * v) - jnp.maximum(v - 1.0, 0.0) * 0.95


if __name__ == "__main__":
    # Small shapes consistent with the module:
    # B=2, num_classes=4, Prim_out_channels=4, PrimaryCaps_n_pix=16 (P=64),
    # Classifier_in_channels=8, Classifier_out_channels=16.
    B, C = 2, 4
    P, Din, Dout = 4 * 16, 8, 16

    key = jax.random.PRNGKey(0)
    kx, kw = jax.random.split(key)
    x = jax.random.normal(kx, (B, P, Din), dtype=jnp.float32)
    W = jax.random.normal(kw, (C, P, Din, Dout), dtype=jnp.float32)

    out = jax.block_until_ready(classifier_caps_forward(x, W))
    ref = jax.block_until_ready(classifier_caps_reference(x, W))

    assert out.shape == (B, C, Dout), f"bad output shape {out.shape}"
    if not jnp.allclose(out, ref, rtol=5e-3, atol=5e-4):
        max_err = float(jnp.max(jnp.abs(out - ref)))
        raise AssertionError(f"kernel/reference mismatch, max abs err = {max_err}")

    print("KERNEL_OK")
</pallas_src>

<mosaic_0001>
module attributes {stable_mosaic.version = 11 : i64} {
  func.func @_caps_routing_kernel(%arg0: i32, %arg1: memref<2x8x64xf32, #tpu.memory_space<vmem>>, %arg2: memref<2x8x16x64xf32, #tpu.memory_space<vmem>>, %arg3: memref<2x2x16xf32, #tpu.memory_space<vmem>>, %arg4: memref<2x16x64xf32, #tpu.memory_space<vmem>>) attributes {dimension_semantics = [#tpu.dimension_semantics<parallel>], iteration_bounds = array<i64: 2>, scalar_prefetch = 0 : i64, scratch_operands = 1 : i64, tpu.core_type = #tpu.core_type<tc>, window_params = [{pipeline_mode = #tpu.pipeline_mode<synchronous>, transform_indices = @transform_0, window_bounds = array<i64: 2, 8, 64>}, {transform_indices = @transform_1, window_bounds = array<i64: 2, 8, 16, 64>}, {transform_indices = @transform_2, window_bounds = array<i64: 2, 2, 16>}]} {
    %c0 = arith.constant 0 : index
    %c0_0 = arith.constant 0 : index
    %c0_1 = arith.constant 0 : index
    %0 = vector.load %arg1[%c0, %c0_0, %c0_1] : memref<2x8x64xf32, #tpu.memory_space<vmem>>, vector<2x8x64xf32>
    %c0_2 = arith.constant 0 : index
    %c0_3 = arith.constant 0 : index
    %c0_4 = arith.constant 0 : index
    %c0_5 = arith.constant 0 : index
    %1 = vector.load %arg2[%c0_2, %c0_3, %c0_4, %c0_5] : memref<2x8x16x64xf32, #tpu.memory_space<vmem>>, vector<1x8x16x64xf32>
    %2 = vector.shape_cast %1 : vector<1x8x16x64xf32> to vector<8x16x64xf32>
    %3 = vector.extract_strided_slice %0 {offsets = [0, 0, 0], sizes = [2, 1, 64], strides = [1, 1, 1]} : vector<2x8x64xf32> to vector<2x1x64xf32>
    %4 = vector.shape_cast %3 : vector<2x1x64xf32> to vector<2x64xf32>
    %5 = vector.shape_cast %4 : vector<2x64xf32> to vector<2x1x64xf32>
    %6 = vector.extract_strided_slice %2 {offsets = [0, 0, 0], sizes = [1, 16, 64], strides = [1, 1, 1]} : vector<8x16x64xf32> to vector<1x16x64xf32>
    %7 = vector.shape_cast %6 : vector<1x16x64xf32> to vector<16x64xf32>
    %8 = vector.shape_cast %7 : vector<16x64xf32> to vector<1x16x64xf32>
    %9 = vector.broadcast %5 : vector<2x1x64xf32> to vector<2x16x64xf32>
    %10 = vector.broadcast %8 : vector<1x16x64xf32> to vector<2x16x64xf32>
    %11 = arith.mulf %9, %10 : vector<2x16x64xf32>
    %12 = vector.extract_strided_slice %0 {offsets = [0, 1, 0], sizes = [2, 1, 64], strides = [1, 1, 1]} : vector<2x8x64xf32> to vector<2x1x64xf32>
    %13 = vector.shape_cast %12 : vector<2x1x64xf32> to vector<2x64xf32>
    %14 = vector.shape_cast %13 : vector<2x64xf32> to vector<2x1x64xf32>
    %15 = vector.extract_strided_slice %2 {offsets = [1, 0, 0], sizes = [1, 16, 64], strides = [1, 1, 1]} : vector<8x16x64xf32> to vector<1x16x64xf32>
    %16 = vector.shape_cast %15 : vector<1x16x64xf32> to vector<16x64xf32>
    %17 = vector.shape_cast %16 : vector<16x64xf32> to vector<1x16x64xf32>
    %18 = vector.broadcast %14 : vector<2x1x64xf32> to vector<2x16x64xf32>
    %19 = vector.broadcast %17 : vector<1x16x64xf32> to vector<2x16x64xf32>
    %20 = arith.mulf %18, %19 : vector<2x16x64xf32>
    %21 = arith.addf %11, %20 : vector<2x16x64xf32>
    %22 = vector.extract_strided_slice %0 {offsets = [0, 2, 0], sizes = [2, 1, 64], strides = [1, 1, 1]} : vector<2x8x64xf32> to vector<2x1x64xf32>
    %23 = vector.shape_cast %22 : vector<2x1x64xf32> to vector<2x64xf32>
    %24 = vector.shape_cast %23 : vector<2x64xf32> to vector<2x1x64xf32>
    %25 = vector.extract_strided_slice %2 {offsets = [2, 0, 0], sizes = [1, 16, 64], strides = [1, 1, 1]} : vector<8x16x64xf32> to vector<1x16x64xf32>
    %26 = vector.shape_cast %25 : vector<1x16x64xf32> to vector<16x64xf32>
    %27 = vector.shape_cast %26 : vector<16x64xf32> to vector<1x16x64xf32>
    %28 = vector.broadcast %24 : vector<2x1x64xf32> to vector<2x16x64xf32>
    %29 = vector.broadcast %27 : vector<1x16x64xf32> to vector<2x16x64xf32>
    %30 = arith.mulf %28, %29 : vector<2x16x64xf32>
    %31 = arith.addf %21, %30 : vector<2x16x64xf32>
    %32 = vector.extract_strided_slice %0 {offsets = [0, 3, 0], sizes = [2, 1, 64], strides = [1, 1, 1]} : vector<2x8x64xf32> to vector<2x1x64xf32>
    %33 = vector.shape_cast %32 : vector<2x1x64xf32> to vector<2x64xf32>
    %34 = vector.shape_cast %33 : vector<2x64xf32> to vector<2x1x64xf32>
    %35 = vector.extract_strided_slice %2 {offsets = [3, 0, 0], sizes = [1, 16, 64], strides = [1, 1, 1]} : vector<8x16x64xf32> to vector<1x16x64xf32>
    %36 = vector.shape_cast %35 : vector<1x16x64xf32> to vector<16x64xf32>
    %37 = vector.shape_cast %36 : vector<16x64xf32> to vector<1x16x64xf32>
    %38 = vector.broadcast %34 : vector<2x1x64xf32> to vector<2x16x64xf32>
    %39 = vector.broadcast %37 : vector<1x16x64xf32> to vector<2x16x64xf32>
    %40 = arith.mulf %38, %39 : vector<2x16x64xf32>
    %41 = arith.addf %31, %40 : vector<2x16x64xf32>
    %42 = vector.extract_strided_slice %0 {offsets = [0, 4, 0], sizes = [2, 1, 64], strides = [1, 1, 1]} : vector<2x8x64xf32> to vector<2x1x64xf32>
    %43 = vector.shape_cast %42 : vector<2x1x64xf32> to vector<2x64xf32>
    %44 = vector.shape_cast %43 : vector<2x64xf32> to vector<2x1x64xf32>
    %45 = vector.extract_strided_slice %2 {offsets = [4, 0, 0], sizes = [1, 16, 64], strides = [1, 1, 1]} : vector<8x16x64xf32> to vector<1x16x64xf32>
    %46 = vector.shape_cast %45 : vector<1x16x64xf32> to vector<16x64xf32>
    %47 = vector.shape_cast %46 : vector<16x64xf32> to vector<1x16x64xf32>
    %48 = vector.broadcast %44 : vector<2x1x64xf32> to vector<2x16x64xf32>
    %49 = vector.broadcast %47 : vector<1x16x64xf32> to vector<2x16x64xf32>
    %50 = arith.mulf %48, %49 : vector<2x16x64xf32>
    %51 = arith.addf %41, %50 : vector<2x16x64xf32>
    %52 = vector.extract_strided_slice %0 {offsets = [0, 5, 0], sizes = [2, 1, 64], strides = [1, 1, 1]} : vector<2x8x64xf32> to vector<2x1x64xf32>
    %53 = vector.shape_cast %52 : vector<2x1x64xf32> to vector<2x64xf32>
    %54 = vector.shape_cast %53 : vector<2x64xf32> to vector<2x1x64xf32>
    %55 = vector.extract_strided_slice %2 {offsets = [5, 0, 0], sizes = [1, 16, 64], strides = [1, 1, 1]} : vector<8x16x64xf32> to vector<1x16x64xf32>
    %56 = vector.shape_cast %55 : vector<1x16x64xf32> to vector<16x64xf32>
    %57 = vector.shape_cast %56 : vector<16x64xf32> to vector<1x16x64xf32>
    %58 = vector.broadcast %54 : vector<2x1x64xf32> to vector<2x16x64xf32>
    %59 = vector.broadcast %57 : vector<1x16x64xf32> to vector<2x16x64xf32>
    %60 = arith.mulf %58, %59 : vector<2x16x64xf32>
    %61 = arith.addf %51, %60 : vector<2x16x64xf32>
    %62 = vector.extract_strided_slice %0 {offsets = [0, 6, 0], sizes = [2, 1, 64], strides = [1, 1, 1]} : vector<2x8x64xf32> to vector<2x1x64xf32>
    %63 = vector.shape_cast %62 : vector<2x1x64xf32> to vector<2x64xf32>
    %64 = vector.shape_cast %63 : vector<2x64xf32> to vector<2x1x64xf32>
    %65 = vector.extract_strided_slice %2 {offsets = [6, 0, 0], sizes = [1, 16, 64], strides = [1, 1, 1]} : vector<8x16x64xf32> to vector<1x16x64xf32>
    %66 = vector.shape_cast %65 : vector<1x16x64xf32> to vector<16x64xf32>
    %67 = vector.shape_cast %66 : vector<16x64xf32> to vector<1x16x64xf32>
    %68 = vector.broadcast %64 : vector<2x1x64xf32> to vector<2x16x64xf32>
    %69 = vector.broadcast %67 : vector<1x16x64xf32> to vector<2x16x64xf32>
    %70 = arith.mulf %68, %69 : vector<2x16x64xf32>
    %71 = arith.addf %61, %70 : vector<2x16x64xf32>
    %72 = vector.extract_strided_slice %0 {offsets = [0, 7, 0], sizes = [2, 1, 64], strides = [1, 1, 1]} : vector<2x8x64xf32> to vector<2x1x64xf32>
    %73 = vector.shape_cast %72 : vector<2x1x64xf32> to vector<2x64xf32>
    %74 = vector.shape_cast %73 : vector<2x64xf32> to vector<2x1x64xf32>
    %75 = vector.extract_strided_slice %2 {offsets = [7, 0, 0], sizes = [1, 16, 64], strides = [1, 1, 1]} : vector<8x16x64xf32> to vector<1x16x64xf32>
    %76 = vector.shape_cast %75 : vector<1x16x64xf32> to vector<16x64xf32>
    %77 = vector.shape_cast %76 : vector<16x64xf32> to vector<1x16x64xf32>
    %78 = vector.broadcast %74 : vector<2x1x64xf32> to vector<2x16x64xf32>
    %79 = vector.broadcast %77 : vector<1x16x64xf32> to vector<2x16x64xf32>
    %80 = arith.mulf %78, %79 : vector<2x16x64xf32>
    %81 = arith.addf %71, %80 : vector<2x16x64xf32>
    %c0_6 = arith.constant 0 : index
    %c0_7 = arith.constant 0 : index
    %c0_8 = arith.constant 0 : index
    %82 = vector.load %arg4[%c0_6, %c0_7, %c0_8] : memref<2x16x64xf32, #tpu.memory_space<vmem>>, vector<2x16x64xf32>
    tpu.vector_store %arg4[%c0_6, %c0_7, %c0_8], %81 {strides = array<i32>} : memref<2x16x64xf32, #tpu.memory_space<vmem>>, vector<2x16x64xf32>,
    %c0_9 = arith.constant 0 : index
    %c0_10 = arith.constant 0 : index
    %c0_11 = arith.constant 0 : index
    %83 = vector.load %arg4[%c0_9, %c0_10, %c0_11] : memref<2x16x64xf32, #tpu.memory_space<vmem>>, vector<2x16x64xf32>
    %cst = arith.constant dense<0.000000e+00> : vector<2x16xf32>
    %84 = vector.multi_reduction <add>, %83, %cst [2] : vector<2x16x64xf32> to vector<2x16xf32>
    %cst_12 = arith.constant 1.562500e-02 : f32
    %85 = vector.broadcast %cst_12 : f32 to vector<2x16xf32>
    %86 = arith.mulf %84, %85 : vector<2x16xf32>
    %87 = arith.mulf %86, %86 : vector<2x16xf32>
    %cst_13 = arith.constant dense<0.000000e+00> : vector<2xf32>
    %88 = vector.multi_reduction <add>, %87, %cst_13 [1] : vector<2x16xf32> to vector<2xf32>
    %89 = vector.shape_cast %88 : vector<2xf32> to vector<2x1xf32>
    %90 = vector.broadcast %89 : vector<2x1xf32> to vector<2x16xf32>
    %91 = arith.mulf %86, %90 : vector<2x16xf32>
    %cst_14 = arith.constant 1.000000e+00 : f32
    %92 = vector.broadcast %cst_14 : f32 to vector<2x1xf32>
    %93 = arith.addf %92, %89 : vector<2x1xf32>
    %94 = vector.broadcast %93 : vector<2x1xf32> to vector<2x16xf32>
    %95 = arith.divf %91, %94 : vector<2x16xf32>
    %96 = math.sqrt %89 : vector<2x1xf32>
    %97 = vector.broadcast %96 : vector<2x1xf32> to vector<2x16xf32>
    %98 = arith.divf %95, %97 : vector<2x16xf32>
    %99 = vector.shape_cast %98 : vector<2x16xf32> to vector<2x16x1xf32>
    %100 = vector.broadcast %99 : vector<2x16x1xf32> to vector<2x16x64xf32>
    %101 = arith.mulf %83, %100 : vector<2x16x64xf32>
    %cst_15 = arith.constant dense<0.000000e+00> : vector<2x64xf32>
    %102 = vector.multi_reduction <add>, %101, %cst_15 [1] : vector<2x16x64xf32> to vector<2x64xf32>
    %cst_16 = arith.constant dense<0xFF800000> : vector<2xf32>
    %103 = vector.multi_reduction <maximumf>, %102, %cst_16 [1] : vector<2x64xf32> to vector<2xf32>
    %104 = vector.shape_cast %103 : vector<2xf32> to vector<2x1xf32>
    %105 = vector.broadcast %104 : vector<2x1xf32> to vector<2x64xf32>
    %106 = arith.subf %102, %105 : vector<2x64xf32>
    %107 = math.exp %106 : vector<2x64xf32>
    %cst_17 = arith.constant dense<0.000000e+00> : vector<2xf32>
    %108 = vector.multi_reduction <add>, %107, %cst_17 [1] : vector<2x64xf32> to vector<2xf32>
    %109 = vector.shape_cast %108 : vector<2xf32> to vector<2x1xf32>
    %110 = vector.broadcast %109 : vector<2x1xf32> to vector<2x64xf32>
    %111 = arith.divf %107, %110 : vector<2x64xf32>
    %112 = vector.shape_cast %111 : vector<2x64xf32> to vector<2x1x64xf32>
    %113 = vector.broadcast %112 : vector<2x1x64xf32> to vector<2x16x64xf32>
    %114 = arith.mulf %113, %83 : vector<2x16x64xf32>
    %cst_18 = arith.constant dense<0.000000e+00> : vector<2x16xf32>
    %115 = vector.multi_reduction <add>, %114, %cst_18 [2] : vector<2x16x64xf32> to vector<2x16xf32>
    %116 = arith.mulf %115, %115 : vector<2x16xf32>
    %cst_19 = arith.constant dense<0.000000e+00> : vector<2xf32>
    %117 = vector.multi_reduction <add>, %116, %cst_19 [1] : vector<2x16xf32> to vector<2xf32>
    %118 = vector.shape_cast %117 : vector<2xf32> to vector<2x1xf32>
    %119 = vector.broadcast %118 : vector<2x1xf32> to vector<2x16xf32>
    %120 = arith.mulf %115, %119 : vector<2x16xf32>
    %cst_20 = arith.constant 1.000000e+00 : f32
    %121 = vector.broadcast %cst_20 : f32 to vector<2x1xf32>
    %122 = arith.addf %121, %118 : vector<2x1xf32>
    %123 = vector.broadcast %122 : vector<2x1xf32> to vector<2x16xf32>
    %124 = arith.divf %120, %123 : vector<2x16xf32>
    %125 = math.sqrt %118 : vector<2x1xf32>
    %126 = vector.broadcast %125 : vector<2x1xf32> to vector<2x16xf32>
    %127 = arith.divf %124, %126 : vector<2x16xf32>
    %128 = vector.shape_cast %127 : vector<2x16xf32> to vector<2x16x1xf32>
    %129 = vector.broadcast %128 : vector<2x16x1xf32> to vector<2x16x64xf32>
    %130 = arith.mulf %83, %129 : vector<2x16x64xf32>
    %cst_21 = arith.constant dense<0.000000e+00> : vector<2x64xf32>
    %131 = vector.multi_reduction <add>, %130, %cst_21 [1] : vector<2x16x64xf32> to vector<2x64xf32>
    %132 = arith.addf %102, %131 : vector<2x64xf32>
    %cst_22 = arith.constant dense<0xFF800000> : vector<2xf32>
    %133 = vector.multi_reduction <maximumf>, %132, %cst_22 [1] : vector<2x64xf32> to vector<2xf32>
    %134 = vector.shape_cast %133 : vector<2xf32> to vector<2x1xf32>
    %135 = vector.broadcast %134 : vector<2x1xf32> to vector<2x64xf32>
    %136 = arith.subf %132, %135 : vector<2x64xf32>
    %137 = math.exp %136 : vector<2x64xf32>
    %cst_23 = arith.constant dense<0.000000e+00> : vector<2xf32>
    %138 = vector.multi_reduction <add>, %137, %cst_23 [1] : vector<2x64xf32> to vector<2xf32>
    %139 = vector.shape_cast %138 : vector<2xf32> to vector<2x1xf32>
    %140 = vector.broadcast %139 : vector<2x1xf32> to vector<2x64xf32>
    %141 = arith.divf %137, %140 : vector<2x64xf32>
    %142 = vector.shape_cast %141 : vector<2x64xf32> to vector<2x1x64xf32>
    %143 = vector.broadcast %142 : vector<2x1x64xf32> to vector<2x16x64xf32>
    %144 = arith.mulf %143, %83 : vector<2x16x64xf32>
    %cst_24 = arith.constant dense<0.000000e+00> : vector<2x16xf32>
    %145 = vector.multi_reduction <add>, %144, %cst_24 [2] : vector<2x16x64xf32> to vector<2x16xf32>
    %146 = arith.mulf %145, %145 : vector<2x16xf32>
    %cst_25 = arith.constant dense<0.000000e+00> : vector<2xf32>
    %147 = vector.multi_reduction <add>, %146, %cst_25 [1] : vector<2x16xf32> to vector<2xf32>
    %148 = vector.shape_cast %147 : vector<2xf32> to vector<2x1xf32>
    %149 = vector.broadcast %148 : vector<2x1xf32> to vector<2x16xf32>
    %150 = arith.mulf %145, %149 : vector<2x16xf32>
    %cst_26 = arith.constant 1.000000e+00 : f32
    %151 = vector.broadcast %cst_26 : f32 to vector<2x1xf32>
    %152 = arith.addf %151, %148 : vector<2x1xf32>
    %153 = vector.broadcast %152 : vector<2x1xf32> to vector<2x16xf32>
    %154 = arith.divf %150, %153 : vector<2x16xf32>
    %155 = math.sqrt %148 : vector<2x1xf32>
    %156 = vector.broadcast %155 : vector<2x1xf32> to vector<2x16xf32>
    %157 = arith.divf %154, %156 : vector<2x16xf32>
    %cst_27 = arith.constant 0.000000e+00 : f32
    %158 = vector.broadcast %cst_27 : f32 to vector<2x16xf32>
    %159 = arith.cmpf oge, %157, %158 : vector<2x16xf32>
    %cst_28 = arith.constant 5.000000e-02 : f32
    %160 = vector.broadcast %cst_28 : f32 to vector<2x16xf32>
    %161 = arith.mulf %160, %157 : vector<2x16xf32>
    %162 = arith.select %159, %157, %161 : vector<2x16xi1>, vector<2x16xf32>
    %cst_29 = arith.constant 1.000000e+00 : f32
    %163 = vector.broadcast %cst_29 : f32 to vector<2x16xf32>
    %164 = arith.subf %157, %163 : vector<2x16xf32>
    %cst_30 = arith.constant 0.000000e+00 : f32
    %165 = vector.broadcast %cst_30 : f32 to vector<2x16xf32>
    %166 = arith.maximumf %164, %165 : vector<2x16xf32>
    %cst_31 = arith.constant 0.949999988 : f32
    %167 = vector.broadcast %cst_31 : f32 to vector<2x16xf32>
    %168 = arith.mulf %166, %167 : vector<2x16xf32>
    %169 = arith.subf %162, %168 : vector<2x16xf32>
    %c0_32 = arith.constant 0 : index
    %c0_33 = arith.constant 0 : index
    %c0_34 = arith.constant 0 : index
    %170 = vector.load %arg3[%c0_32, %c0_33, %c0_34] : memref<2x2x16xf32, #tpu.memory_space<vmem>>, vector<1x2x16xf32>
    %171 = vector.shape_cast %170 : vector<1x2x16xf32> to vector<2x16xf32>
    %172 = vector.shape_cast %169 : vector<2x16xf32> to vector<1x2x16xf32>
    tpu.vector_store %arg3[%c0_32, %c0_33, %c0_34], %172 {strides = array<i32>} : memref<2x2x16xf32, #tpu.memory_space<vmem>>, vector<1x2x16xf32>,
    %c1 = arith.constant 1 : index
    %c0_35 = arith.constant 0 : index
    %c0_36 = arith.constant 0 : index
    %c0_37 = arith.constant 0 : index
    %173 = vector.load %arg2[%c1, %c0_35, %c0_36, %c0_37] : memref<2x8x16x64xf32, #tpu.memory_space<vmem>>, vector<1x8x16x64xf32>
    %174 = vector.shape_cast %173 : vector<1x8x16x64xf32> to vector<8x16x64xf32>
    %175 = vector.extract_strided_slice %0 {offsets = [0, 0, 0], sizes = [2, 1, 64], strides = [1, 1, 1]} : vector<2x8x64xf32> to vector<2x1x64xf32>
    %176 = vector.shape_cast %175 : vector<2x1x64xf32> to vector<2x64xf32>
    %177 = vector.shape_cast %176 : vector<2x64xf32> to vector<2x1x64xf32>
    %178 = vector.extract_strided_slice %174 {offsets = [0, 0, 0], sizes = [1, 16, 64], strides = [1, 1, 1]} : vector<8x16x64xf32> to vector<1x16x64xf32>
    %179 = vector.shape_cast %178 : vector<1x16x64xf32> to vector<16x64xf32>
    %180 = vector.shape_cast %179 : vector<16x64xf32> to vector<1x16x64xf32>
    %181 = vector.broadcast %177 : vector<2x1x64xf32> to vector<2x16x64xf32>
    %182 = vector.broadcast %180 : vector<1x16x64xf32> to vector<2x16x64xf32>
    %183 = arith.mulf %181, %182 : vector<2x16x64xf32>
    %184 = vector.extract_strided_slice %0 {offsets = [0, 1, 0], sizes = [2, 1, 64], strides = [1, 1, 1]} : vector<2x8x64xf32> to vector<2x1x64xf32>
    %185 = vector.shape_cast %184 : vector<2x1x64xf32> to vector<2x64xf32>
    %186 = vector.shape_cast %185 : vector<2x64xf32> to vector<2x1x64xf32>
    %187 = vector.extract_strided_slice %174 {offsets = [1, 0, 0], sizes = [1, 16, 64], strides = [1, 1, 1]} : vector<8x16x64xf32> to vector<1x16x64xf32>
    %188 = vector.shape_cast %187 : vector<1x16x64xf32> to vector<16x64xf32>
    %189 = vector.shape_cast %188 : vector<16x64xf32> to vector<1x16x64xf32>
    %190 = vector.broadcast %186 : vector<2x1x64xf32> to vector<2x16x64xf32>
    %191 = vector.broadcast %189 : vector<1x16x64xf32> to vector<2x16x64xf32>
    %192 = arith.mulf %190, %191 : vector<2x16x64xf32>
    %193 = arith.addf %183, %192 : vector<2x16x64xf32>
    %194 = vector.extract_strided_slice %0 {offsets = [0, 2, 0], sizes = [2, 1, 64], strides = [1, 1, 1]} : vector<2x8x64xf32> to vector<2x1x64xf32>
    %195 = vector.shape_cast %194 : vector<2x1x64xf32> to vector<2x64xf32>
    %196 = vector.shape_cast %195 : vector<2x64xf32> to vector<2x1x64xf32>
    %197 = vector.extract_strided_slice %174 {offsets = [2, 0, 0], sizes = [1, 16, 64], strides = [1, 1, 1]} : vector<8x16x64xf32> to vector<1x16x64xf32>
    %198 = vector.shape_cast %197 : vector<1x16x64xf32> to vector<16x64xf32>
    %199 = vector.shape_cast %198 : vector<16x64xf32> to vector<1x16x64xf32>
    %200 = vector.broadcast %196 : vector<2x1x64xf32> to vector<2x16x64xf32>
    %201 = vector.broadcast %199 : vector<1x16x64xf32> to vector<2x16x64xf32>
    %202 = arith.mulf %200, %201 : vector<2x16x64xf32>
    %203 = arith.addf %193, %202 : vector<2x16x64xf32>
    %204 = vector.extract_strided_slice %0 {offsets = [0, 3, 0], sizes = [2, 1, 64], strides = [1, 1, 1]} : vector<2x8x64xf32> to vector<2x1x64xf32>
    %205 = vector.shape_cast %204 : vector<2x1x64xf32> to vector<2x64xf32>
    %206 = vector.shape_cast %205 : vector<2x64xf32> to vector<2x1x64xf32>
    %207 = vector.extract_strided_slice %174 {offsets = [3, 0, 0], sizes = [1, 16, 64], strides = [1, 1, 1]} : vector<8x16x64xf32> to vector<1x16x64xf32>
    %208 = vector.shape_cast %207 : vector<1x16x64xf32> to vector<16x64xf32>
    %209 = vector.shape_cast %208 : vector<16x64xf32> to vector<1x16x64xf32>
    %210 = vector.broadcast %206 : vector<2x1x64xf32> to vector<2x16x64xf32>
    %211 = vector.broadcast %209 : vector<1x16x64xf32> to vector<2x16x64xf32>
    %212 = arith.mulf %210, %211 : vector<2x16x64xf32>
    %213 = arith.addf %203, %212 : vector<2x16x64xf32>
    %214 = vector.extract_strided_slice %0 {offsets = [0, 4, 0], sizes = [2, 1, 64], strides = [1, 1, 1]} : vector<2x8x64xf32> to vector<2x1x64xf32>
    %215 = vector.shape_cast %214 : vector<2x1x64xf32> to vector<2x64xf32>
    %216 = vector.shape_cast %215 : vector<2x64xf32> to vector<2x1x64xf32>
    %217 = vector.extract_strided_slice %174 {offsets = [4, 0, 0], sizes = [1, 16, 64], strides = [1, 1, 1]} : vector<8x16x64xf32> to vector<1x16x64xf32>
    %218 = vector.shape_cast %217 : vector<1x16x64xf32> to vector<16x64xf32>
    %219 = vector.shape_cast %218 : vector<16x64xf32> to vector<1x16x64xf32>
    %220 = vector.broadcast %216 : vector<2x1x64xf32> to vector<2x16x64xf32>
    %221 = vector.broadcast %219 : vector<1x16x64xf32> to vector<2x16x64xf32>
    %222 = arith.mulf %220, %221 : vector<2x16x64xf32>
    %223 = arith.addf %213, %222 : vector<2x16x64xf32>
    %224 = vector.extract_strided_slice %0 {offsets = [0, 5, 0], sizes = [2, 1, 64], strides = [1, 1, 1]} : vector<2x8x64xf32> to vector<2x1x64xf32>
    %225 = vector.shape_cast %224 : vector<2x1x64xf32> to vector<2x64xf32>
    %226 = vector.shape_cast %225 : vector<2x64xf32> to vector<2x1x64xf32>
    %227 = vector.extract_strided_slice %174 {offsets = [5, 0, 0], sizes = [1, 16, 64], strides = [1, 1, 1]} : vector<8x16x64xf32> to vector<1x16x64xf32>
    %228 = vector.shape_cast %227 : vector<1x16x64xf32> to vector<16x64xf32>
    %229 = vector.shape_cast %228 : vector<16x64xf32> to vector<1x16x64xf32>
    %230 = vector.broadcast %226 : vector<2x1x64xf32> to vector<2x16x64xf32>
    %231 = vector.broadcast %229 : vector<1x16x64xf32> to vector<2x16x64xf32>
    %232 = arith.mulf %230, %231 : vector<2x16x64xf32>
    %233 = arith.addf %223, %232 : vector<2x16x64xf32>
    %234 = vector.extract_strided_slice %0 {offsets = [0, 6, 0], sizes = [2, 1, 64], strides = [1, 1, 1]} : vector<2x8x64xf32> to vector<2x1x64xf32>
    %235 = vector.shape_cast %234 : vector<2x1x64xf32> to vector<2x64xf32>
    %236 = vector.shape_cast %235 : vector<2x64xf32> to vector<2x1x64xf32>
    %237 = vector.extract_strided_slice %174 {offsets = [6, 0, 0], sizes = [1, 16, 64], strides = [1, 1, 1]} : vector<8x16x64xf32> to vector<1x16x64xf32>
    %238 = vector.shape_cast %237 : vector<1x16x64xf32> to vector<16x64xf32>
    %239 = vector.shape_cast %238 : vector<16x64xf32> to vector<1x16x64xf32>
    %240 = vector.broadcast %236 : vector<2x1x64xf32> to vector<2x16x64xf32>
    %241 = vector.broadcast %239 : vector<1x16x64xf32> to vector<2x16x64xf32>
    %242 = arith.mulf %240, %241 : vector<2x16x64xf32>
    %243 = arith.addf %233, %242 : vector<2x16x64xf32>
    %244 = vector.extract_strided_slice %0 {offsets = [0, 7, 0], sizes = [2, 1, 64], strides = [1, 1, 1]} : vector<2x8x64xf32> to vector<2x1x64xf32>
    %245 = vector.shape_cast %244 : vector<2x1x64xf32> to vector<2x64xf32>
    %246 = vector.shape_cast %245 : vector<2x64xf32> to vector<2x1x64xf32>
    %247 = vector.extract_strided_slice %174 {offsets = [7, 0, 0], sizes = [1, 16, 64], strides = [1, 1, 1]} : vector<8x16x64xf32> to vector<1x16x64xf32>
    %248 = vector.shape_cast %247 : vector<1x16x64xf32> to vector<16x64xf32>
    %249 = vector.shape_cast %248 : vector<16x64xf32> to vector<1x16x64xf32>
    %250 = vector.broadcast %246 : vector<2x1x64xf32> to vector<2x16x64xf32>
    %251 = vector.broadcast %249 : vector<1x16x64xf32> to vector<2x16x64xf32>
    %252 = arith.mulf %250, %251 : vector<2x16x64xf32>
    %253 = arith.addf %243, %252 : vector<2x16x64xf32>
    %c0_38 = arith.constant 0 : index
    %c0_39 = arith.constant 0 : index
    %c0_40 = arith.constant 0 : index
    %254 = vector.load %arg4[%c0_38, %c0_39, %c0_40] : memref<2x16x64xf32, #tpu.memory_space<vmem>>, vector<2x16x64xf32>
    tpu.vector_store %arg4[%c0_38, %c0_39, %c0_40], %253 {strides = array<i32>} : memref<2x16x64xf32, #tpu.memory_space<vmem>>, vector<2x16x64xf32>,
    %c0_41 = arith.constant 0 : index
    %c0_42 = arith.constant 0 : index
    %c0_43 = arith.constant 0 : index
    %255 = vector.load %arg4[%c0_41, %c0_42, %c0_43] : memref<2x16x64xf32, #tpu.memory_space<vmem>>, vector<2x16x64xf32>
    %cst_44 = arith.constant dense<0.000000e+00> : vector<2x16xf32>
    %256 = vector.multi_reduction <add>, %255, %cst_44 [2] : vector<2x16x64xf32> to vector<2x16xf32>
    %cst_45 = arith.constant 1.562500e-02 : f32
    %257 = vector.broadcast %cst_45 : f32 to vector<2x16xf32>
    %258 = arith.mulf %256, %257 : vector<2x16xf32>
    %259 = arith.mulf %258, %258 : vector<2x16xf32>
    %cst_46 = arith.constant dense<0.000000e+00> : vector<2xf32>
    %260 = vector.multi_reduction <add>, %259, %cst_46 [1] : vector<2x16xf32> to vector<2xf32>
    %261 = vector.shape_cast %260 : vector<2xf32> to vector<2x1xf32>
    %262 = vector.broadcast %261 : vector<2x1xf32> to vector<2x16xf32>
    %263 = arith.mulf %258, %262 : vector<2x16xf32>
    %cst_47 = arith.constant 1.000000e+00 : f32
    %264 = vector.broadcast %cst_47 : f32 to vector<2x1xf32>
    %265 = arith.addf %264, %261 : vector<2x1xf32>
    %266 = vector.broadcast %265 : vector<2x1xf32> to vector<2x16xf32>
    %267 = arith.divf %263, %266 : vector<2x16xf32>
    %268 = math.sqrt %261 : vector<2x1xf32>
    %269 = vector.broadcast %268 : vector<2x1xf32> to vector<2x16xf32>
    %270 = arith.divf %267, %269 : vector<2x16xf32>
    %271 = vector.shape_cast %270 : vector<2x16xf32> to vector<2x16x1xf32>
    %272 = vector.broadcast %271 : vector<2x16x1xf32> to vector<2x16x64xf32>
    %273 = arith.mulf %255, %272 : vector<2x16x64xf32>
    %cst_48 = arith.constant dense<0.000000e+00> : vector<2x64xf32>
    %274 = vector.multi_reduction <add>, %273, %cst_48 [1] : vector<2x16x64xf32> to vector<2x64xf32>
    %cst_49 = arith.constant dense<0xFF800000> : vector<2xf32>
    %275 = vector.multi_reduction <maximumf>, %274, %cst_49 [1] : vector<2x64xf32> to vector<2xf32>
    %276 = vector.shape_cast %275 : vector<2xf32> to vector<2x1xf32>
    %277 = vector.broadcast %276 : vector<2x1xf32> to vector<2x64xf32>
    %278 = arith.subf %274, %277 : vector<2x64xf32>
    %279 = math.exp %278 : vector<2x64xf32>
    %cst_50 = arith.constant dense<0.000000e+00> : vector<2xf32>
    %280 = vector.multi_reduction <add>, %279, %cst_50 [1] : vector<2x64xf32> to vector<2xf32>
    %281 = vector.shape_cast %280 : vector<2xf32> to vector<2x1xf32>
    %282 = vector.broadcast %281 : vector<2x1xf32> to vector<2x64xf32>
    %283 = arith.divf %279, %282 : vector<2x64xf32>
    %284 = vector.shape_cast %283 : vector<2x64xf32> to vector<2x1x64xf32>
    %285 = vector.broadcast %284 : vector<2x1x64xf32> to vector<2x16x64xf32>
    %286 = arith.mulf %285, %255 : vector<2x16x64xf32>
    %cst_51 = arith.constant dense<0.000000e+00> : vector<2x16xf32>
    %287 = vector.multi_reduction <add>, %286, %cst_51 [2] : vector<2x16x64xf32> to vector<2x16xf32>
    %288 = arith.mulf %287, %287 : vector<2x16xf32>
    %cst_52 = arith.constant dense<0.000000e+00> : vector<2xf32>
    %289 = vector.multi_reduction <add>, %288, %cst_52 [1] : vector<2x16xf32> to vector<2xf32>
    %290 = vector.shape_cast %289 : vector<2xf32> to vector<2x1xf32>
    %291 = vector.broadcast %290 : vector<2x1xf32> to vector<2x16xf32>
    %292 = arith.mulf %287, %291 : vector<2x16xf32>
    %cst_53 = arith.constant 1.000000e+00 : f32
    %293 = vector.broadcast %cst_53 : f32 to vector<2x1xf32>
    %294 = arith.addf %293, %290 : vector<2x1xf32>
    %295 = vector.broadcast %294 : vector<2x1xf32> to vector<2x16xf32>
    %296 = arith.divf %292, %295 : vector<2x16xf32>
    %297 = math.sqrt %290 : vector<2x1xf32>
    %298 = vector.broadcast %297 : vector<2x1xf32> to vector<2x16xf32>
    %299 = arith.divf %296, %298 : vector<2x16xf32>
    %300 = vector.shape_cast %299 : vector<2x16xf32> to vector<2x16x1xf32>
    %301 = vector.broadcast %300 : vector<2x16x1xf32> to vector<2x16x64xf32>
    %302 = arith.mulf %255, %301 : vector<2x16x64xf32>
    %cst_54 = arith.constant dense<0.000000e+00> : vector<2x64xf32>
    %303 = vector.multi_reduction <add>, %302, %cst_54 [1] : vector<2x16x64xf32> to vector<2x64xf32>
    %304 = arith.addf %274, %303 : vector<2x64xf32>
    %cst_55 = arith.constant dense<0xFF800000> : vector<2xf32>
    %305 = vector.multi_reduction <maximumf>, %304, %cst_55 [1] : vector<2x64xf32> to vector<2xf32>
    %306 = vector.shape_cast %305 : vector<2xf32> to vector<2x1xf32>
    %307 = vector.broadcast %306 : vector<2x1xf32> to vector<2x64xf32>
    %308 = arith.subf %304, %307 : vector<2x64xf32>
    %309 = math.exp %308 : vector<2x64xf32>
    %cst_56 = arith.constant dense<0.000000e+00> : vector<2xf32>
    %310 = vector.multi_reduction <add>, %309, %cst_56 [1] : vector<2x64xf32> to vector<2xf32>
    %311 = vector.shape_cast %310 : vector<2xf32> to vector<2x1xf32>
    %312 = vector.broadcast %311 : vector<2x1xf32> to vector<2x64xf32>
    %313 = arith.divf %309, %312 : vector<2x64xf32>
    %314 = vector.shape_cast %313 : vector<2x64xf32> to vector<2x1x64xf32>
    %315 = vector.broadcast %314 : vector<2x1x64xf32> to vector<2x16x64xf32>
    %316 = arith.mulf %315, %255 : vector<2x16x64xf32>
    %cst_57 = arith.constant dense<0.000000e+00> : vector<2x16xf32>
    %317 = vector.multi_reduction <add>, %316, %cst_57 [2] : vector<2x16x64xf32> to vector<2x16xf32>
    %318 = arith.mulf %317, %317 : vector<2x16xf32>
    %cst_58 = arith.constant dense<0.000000e+00> : vector<2xf32>
    %319 = vector.multi_reduction <add>, %318, %cst_58 [1] : vector<2x16xf32> to vector<2xf32>
    %320 = vector.shape_cast %319 : vector<2xf32> to vector<2x1xf32>
    %321 = vector.broadcast %320 : vector<2x1xf32> to vector<2x16xf32>
    %322 = arith.mulf %317, %321 : vector<2x16xf32>
    %cst_59 = arith.constant 1.000000e+00 : f32
    %323 = vector.broadcast %cst_59 : f32 to vector<2x1xf32>
    %324 = arith.addf %323, %320 : vector<2x1xf32>
    %325 = vector.broadcast %324 : vector<2x1xf32> to vector<2x16xf32>
    %326 = arith.divf %322, %325 : vector<2x16xf32>
    %327 = math.sqrt %320 : vector<2x1xf32>
    %328 = vector.broadcast %327 : vector<2x1xf32> to vector<2x16xf32>
    %329 = arith.divf %326, %328 : vector<2x16xf32>
    %cst_60 = arith.constant 0.000000e+00 : f32
    %330 = vector.broadcast %cst_60 : f32 to vector<2x16xf32>
    %331 = arith.cmpf oge, %329, %330 : vector<2x16xf32>
    %cst_61 = arith.constant 5.000000e-02 : f32
    %332 = vector.broadcast %cst_61 : f32 to vector<2x16xf32>
    %333 = arith.mulf %332, %329 : vector<2x16xf32>
    %334 = arith.select %331, %329, %333 : vector<2x16xi1>, vector<2x16xf32>
    %cst_62 = arith.constant 1.000000e+00 : f32
    %335 = vector.broadcast %cst_62 : f32 to vector<2x16xf32>
    %336 = arith.subf %329, %335 : vector<2x16xf32>
    %cst_63 = arith.constant 0.000000e+00 : f32
    %337 = vector.broadcast %cst_63 : f32 to vector<2x16xf32>
    %338 = arith.maximumf %336, %337 : vector<2x16xf32>
    %cst_64 = arith.constant 0.949999988 : f32
    %339 = vector.broadcast %cst_64 : f32 to vector<2x16xf32>
    %340 = arith.mulf %338, %339 : vector<2x16xf32>
    %341 = arith.subf %334, %340 : vector<2x16xf32>
    %c1_65 = arith.constant 1 : index
    %c0_66 = arith.constant 0 : index
    %c0_67 = arith.constant 0 : index
    %342 = vector.load %arg3[%c1_65, %c0_66, %c0_67] : memref<2x2x16xf32, #tpu.memory_space<vmem>>, vector<1x2x16xf32>
    %343 = vector.shape_cast %342 : vector<1x2x16xf32> to vector<2x16xf32>
    %344 = vector.shape_cast %341 : vector<2x16xf32> to vector<1x2x16xf32>
    tpu.vector_store %arg3[%c1_65, %c0_66, %c0_67], %344 {strides = array<i32>} : memref<2x2x16xf32, #tpu.memory_space<vmem>>, vector<1x2x16xf32>,
    return
  }
  func.func @transform_0(%arg0: i32) -> (i32, i32, i32) {
    %c0_i32 = arith.constant 0 : i32
    %c0_i32_0 = arith.constant 0 : i32
    %c0_i32_1 = arith.constant 0 : i32
    %c0_i32_2 = arith.constant 0 : i32
    return %c0_i32, %c0_i32_0, %c0_i32_1 : i32, i32, i32
  }
  func.func @transform_1(%arg0: i32) -> (i32, i32, i32, i32) {
    %c0_i32 = arith.constant 0 : i32
    %c0_i32_0 = arith.constant 0 : i32
    %c0_i32_1 = arith.constant 0 : i32
    %c0_i32_2 = arith.constant 0 : i32
    return %arg0, %c0_i32, %c0_i32_0, %c0_i32_1 : i32, i32, i32, i32
  }
  func.func @transform_2(%arg0: i32) -> (i32, i32, i32) {
    %c0_i32 = arith.constant 0 : i32
    %c0_i32_0 = arith.constant 0 : i32
    %c0_i32_1 = arith.constant 0 : i32
    return %arg0, %c0_i32, %c0_i32_0 : i32, i32, i32
  }
}

</mosaic_0001>

<llo_original>
// kernel: classifier_caps_forward.1
$region0: #{classifier_caps_forward.1}
  #allocation0 [shape = 'u32[]', space=smem, size = 0x4, offset = 0x4, fixed_abs, tag = 'smem constant byte address 0x4 - core index']
  #allocation1 [shape = 'u32[72,128]{1,0:T(1,128)}', space=vmem, size = 0x9000, scoped, tag = 'internal scratch']
  #allocation2 [shape = 'f32[2,16,64]{2,1,0:T(8,128)}', space=vmem, size = 0x4000, scoped, tag = 'scratch operand']
  %s0 = inlined_call_operand.hbm [shape: f32[2,8,64], index: 0, kind: input, shape index: {}]
  %s1 = inlined_call_operand.hbm [shape: f32[4,8,16,64], index: 1, kind: input, shape index: {}]
  %s2 = inlined_call_operand.vmem [shape: f32[4,2,16], index: 2, kind: output, shape index: {}]
  %s3 = sld [smem:[#allocation0]]
  $region49: #{classifier_caps_forward.1} parent=0
    _
  %s5 = ssub.s32 1, %s3
  %s6 = scalar_select 0, %s5, %s3
  $region1: #{classifier_caps_forward.1} parent=0
    #allocation3 [shape = 'u8[8192]{0}', space=vmem, size = 0x2000, scoped, tag = 'input window, operand 0, single buffered']
    #allocation4 [shape = 's32[2]{0}', space=sflag, size = 0x8, scoped, tag = 'scoped memory for classifier_caps_forward.1']
    #allocation5 [shape = 'u8[262144]{0}', space=vmem, size = 0x40000, scoped, tag = 'input window, operand 1']
    #allocation6 [shape = 's32[2]{0}', space=sflag, size = 0x8, scoped, tag = 'scoped memory for classifier_caps_forward.1']
    %7 = vsyncpa [#allocation4], 0
    %8 = vsyncpa [#allocation6], 0
    %s9 = scalar_lea.sflag [#allocation6], 1
    %10 = vsyncpa %s9, 0
    loop: start=0, step=1, limit=4
    $region2: #{classifier_caps_forward.1} parent=1 // loop_pre_header
      _
    $region3: #{classifier_caps_forward.1} parent=1 // loop_header
      %s12 = sphi 0, %s16
      %p13 = scmp.ge.s32.totalorder %s12, 4
      %s20 = sphi 0, %s20
      %s22 = sphi 0, %s20
      %s23 = sphi 0, %s22
      %s37 = sphi 0, %s23
      %s43 = sphi 0, %s45
      %s46 = sphi 0, %s43
      %s47 = sphi 0, %s46
      %s63 = sphi 0, %s47
      %s69 = sphi 0, %s71
      %s72 = sphi 0, %s69
      %s73 = sphi 0, %s72
      %s89 = sphi 0, %s73
    $region4: #{classifier_caps_forward.1} parent=1 // loop_header_branch
      %15 = sbr.rel (%p13) target = $region8
    $region5: #{classifier_caps_forward.1} parent=1 // loop_body
      %s17 = ssub.s32 %s12, 1
      %s18 = ssub.s32 %s12, 2
      %s19 = sadd.s32 %s12, 1
      %s21 = sadd.s32 %s20, 1
      %p24 = scmp.eq.s32.totalorder %s12, 1
      %p25 = scmp.ne.s32.totalorder %s20, %s22
      %p26 = scmp.eq.s32.totalorder %s12, 0
      %p27 = por %p25, %p26
      %p28 = scmp.ne.s32.totalorder %s20, %s22
      %p29 = scmp.eq.s32.totalorder %s17, 1
      %p30 = por %p28, %p29
      %p31 = scmp.ne.s32.totalorder %s22, %s23
      %p32 = scmp.eq.s32.totalorder %s17, 0
      %p33 = por %p31, %p32
      %p34 = scmp.ne.s32.totalorder %s22, %s23
      %p35 = scmp.eq.s32.totalorder %s18, 1
      %p36 = por %p34, %p35
      %p38 = scmp.ne.s32.totalorder %s23, %s37
      %p39 = scmp.eq.s32.totalorder %s18, 0
      %p40 = por %p38, %p39
      %s41 = ssub.s32 %s12, %s19
      %p42 = scmp.eq.s32.totalorder %s41, 0
      %s44 = sadd.s32 %s43, 1
      %s45 = scalar_select %p42, %s43, %s44
      %p48 = pneg %p42
      %p49 = scmp.eq.s32.totalorder %s12, 1
      %p50 = por %p48, %p49
      %p51 = scmp.ne.s32.totalorder %s43, %s46
      %p52 = scmp.eq.s32.totalorder %s12, 0
      %p53 = por %p51, %p52
      %p54 = scmp.ne.s32.totalorder %s43, %s46
      %p55 = scmp.eq.s32.totalorder %s17, 1
      %p56 = por %p54, %p55
      %p57 = scmp.ne.s32.totalorder %s46, %s47
      %p58 = scmp.eq.s32.totalorder %s17, 0
      %p59 = por %p57, %p58
      %p60 = scmp.ne.s32.totalorder %s46, %s47
      %p61 = scmp.eq.s32.totalorder %s18, 1
      %p62 = por %p60, %p61
      %p64 = scmp.ne.s32.totalorder %s47, %s63
      %p65 = scmp.eq.s32.totalorder %s18, 0
      %p66 = por %p64, %p65
      %s67 = ssub.s32 %s12, %s19
      %p68 = scmp.eq.s32.totalorder %s67, 0
      %s70 = sadd.s32 %s69, 1
      %s71 = scalar_select %p68, %s69, %s70
      %p74 = pneg %p68
      %p75 = scmp.eq.s32.totalorder %s12, 1
      %p76 = por %p74, %p75
      %p77 = scmp.ne.s32.totalorder %s69, %s72
      %p78 = scmp.eq.s32.totalorder %s12, 0
      %p79 = por %p77, %p78
      %p80 = scmp.ne.s32.totalorder %s69, %s72
      %p81 = scmp.eq.s32.totalorder %s17, 1
      %p82 = por %p80, %p81
      %p83 = scmp.ne.s32.totalorder %s72, %s73
      %p84 = scmp.eq.s32.totalorder %s17, 0
      %p85 = por %p83, %p84
      %p86 = scmp.ne.s32.totalorder %s72, %s73
      %p87 = scmp.eq.s32.totalorder %s18, 1
      %p88 = por %p86, %p87
      %p90 = scmp.ne.s32.totalorder %s73, %s89
      %p91 = scmp.eq.s32.totalorder %s18, 0
      %p92 = por %p90, %p91
      %p93 = scmp.le.s32.totalorder 1, %s12
      %p94 = scmp.lt.s32.totalorder %s12, 3
      %p95 = pnand %p93, %p94
      %p96 = pneg %p95
      // Predicated region
      $region9: #{classifier_caps_forward.1} parent=5 // pred_check
        _
      $region10: #{classifier_caps_forward.1} parent=5 // pred_check_branch
        %98 = sbr.rel (%p95) target = $region12
      $region11: #{classifier_caps_forward.1} parent=5 // pred_region
        %s99 = ssub.s32 %s12, 1
        // Predicated region
        $region13: #{classifier_caps_forward.1} parent=11 // pred_check
          %p100 = pneg %p33
        $region14: #{classifier_caps_forward.1} parent=11 // pred_check_branch
          %102 = sbr.rel (%p100) target = $region16
        $region15: #{classifier_caps_forward.1} parent=11 // pred_region
          %104 = vsyncadd [#allocation4], 0
          %s105 = sshll.u32 %s0, 4
          %s106 = int_to_ptr.hbm [resolvable:$true] %s105
          %s107 = sshll.u32 [#allocation3], 4
          %s108 = int_to_ptr.vmem [resolvable:$true] %s107
          %113 = dma.hbm_to_vmem [thread:$0]  %s106, 256, %s108, [#allocation4], 128, 128, 8
        $region16: #{classifier_caps_forward.1} parent=11 // pred_fallthru
          _
      $region12: #{classifier_caps_forward.1} parent=5 // pred_fallthru
        _
      %p114 = scmp.lt.s32.totalorder %s12, 2
      // Predicated region
      $region17: #{classifier_caps_forward.1} parent=5 // pred_check
        %p115 = pneg %p114
      $region18: #{classifier_caps_forward.1} parent=5 // pred_check_branch
        %117 = sbr.rel (%p115) target = $region20
      $region19: #{classifier_caps_forward.1} parent=5 // pred_region
        // Predicated region
        $region21: #{classifier_caps_forward.1} parent=19 // pred_check
          %p118 = pneg %p53
        $region22: #{classifier_caps_forward.1} parent=19 // pred_check_branch
          %120 = sbr.rel (%p118) target = $region24
        $region23: #{classifier_caps_forward.1} parent=19 // pred_region
          %s121 = sand.u32 %s43, 1
          %s122 = scalar_lea.sflag [#allocation6], %s121
          %s123 = sand.u32 %s43, 1
          %s124 = smul.addr %s123, 256
          %s125 = scalar_lea.vmem [#allocation5], %s124
          %s126 = smul.u32 2, %s12
          %128 = vsyncadd %s122, 0
          %s129 = smul.addr %s126, 16
          %s130 = smul.addr %s129, 8
          %s131 = scalar_lea.hbm %s1, %s130
          %s132 = sshll.u32 %s131, 4
          %s133 = int_to_ptr.hbm [resolvable:$true] %s132
          %s134 = sshll.u32 %s125, 4
          %s135 = int_to_ptr.vmem [resolvable:$true] %s134
          %140 = dma.hbm_to_vmem [thread:$0]  %s133, 4096, %s135, %s122, 128, 128, 8
        $region24: #{classifier_caps_forward.1} parent=19 // pred_fallthru
          _
      $region20: #{classifier_caps_forward.1} parent=5 // pred_fallthru
        _
      %p141 = scmp.le.s32.totalorder 1, %s12
      %p142 = scmp.lt.s32.totalorder %s12, 3
      %p143 = pnand %p141, %p142
      %p144 = pneg %p143
      // Predicated region
      $region25: #{classifier_caps_forward.1} parent=5 // pred_check
        _
      $region26: #{classifier_caps_forward.1} parent=5 // pred_check_branch
        %146 = sbr.rel (%p143) target = $region28
      $region27: #{classifier_caps_forward.1} parent=5 // pred_region
        %s147 = ssub.s32 %s12, 1
        // Predicated region
        $region29: #{classifier_caps_forward.1} parent=27 // pred_check
          %p148 = pneg %p33
        $region30: #{classifier_caps_forward.1} parent=27 // pred_check_branch
          %150 = sbr.rel (%p148) target = $region32
        $region31: #{classifier_caps_forward.1} parent=27 // pred_region
          %152 = dma.done [#allocation4], 256
        $region32: #{classifier_caps_forward.1} parent=27 // pred_fallthru
          _
        %s153 = sand.u32 %s46, 1
        %s154 = scalar_lea.sflag [#allocation6], %s153
        %s155 = sand.u32 %s46, 1
        %s156 = smul.addr %s155, 256
        %s157 = scalar_lea.vmem [#allocation5], %s156
        // Predicated region
        $region33: #{classifier_caps_forward.1} parent=27 // pred_check
          %p158 = pneg %p59
        $region34: #{classifier_caps_forward.1} parent=27 // pred_check_branch
          %160 = sbr.rel (%p158) target = $region36
        $region35: #{classifier_caps_forward.1} parent=27 // pred_region
          %162 = dma.done %s154, 4096
        $region36: #{classifier_caps_forward.1} parent=27 // pred_fallthru
          _
        %p163 = pneg %p33
        %p164 = pneg %p30
        %s165 = sand.u32 %s46, 1
        %s166 = scalar_lea.sflag [#allocation6], %s165
        %s167 = sand.u32 %s46, 1
        %s168 = smul.addr %s167, 256
        %s169 = scalar_lea.vmem [#allocation5], %s168
        %p170 = pneg %p59
        %p171 = pneg %p56
        %p172 = pneg %p85
        %p173 = pneg %p82
        %s174 = smul.u32 2, %s17
        %p175 = scmp.lt.s32.totalorder %s174, 3
        %s176 = scalar_select %p175, %s174, 3
        %s177 = smul.addr %s176, 2
        %s178 = scalar_lea.vmem %s2, %s177
        %s179 = smul.u32 2, %s17
        %s180 = smul.u32 2, %s17
        %p181 = scmp.lt.s32.totalorder %s180, 3
        %s182 = scalar_select %p181, %s180, 3
        %s183 = smul.addr %s182, 2
        %s184 = scalar_lea.vmem %s2, %s183
        %s185 = smul.u32 2, %s17
        %v186 = vld [vmem:[#allocation3] sm:$0xff]
        %v187 = vld [vmem:[#allocation3 + $0x8] sm:$0xff]
        %v188 = vld [vmem:[%s157] sm:$0xff]
        %v189 = vld [vmem:[%s157 + $0x8] sm:$0xff]
        %v190 = vld [vmem:[%s157 + $0x10] sm:$0xff]
        %v191 = vld [vmem:[%s157 + $0x18] sm:$0xff]
        %v192 = vld [vmem:[%s157 + $0x20] sm:$0xff]
        %v193 = vld [vmem:[%s157 + $0x28] sm:$0xff]
        %v194 = vld [vmem:[%s157 + $0x30] sm:$0xff]
        %v195 = vld [vmem:[%s157 + $0x38] sm:$0xff]
        %v196 = vld [vmem:[%s157 + $0x40] sm:$0xff]
        %v197 = vld [vmem:[%s157 + $0x48] sm:$0xff]
        %v198 = vld [vmem:[%s157 + $0x50] sm:$0xff]
        %v199 = vld [vmem:[%s157 + $0x58] sm:$0xff]
        %v200 = vld [vmem:[%s157 + $0x60] sm:$0xff]
        %v201 = vld [vmem:[%s157 + $0x68] sm:$0xff]
        %v202 = vld [vmem:[%s157 + $0x70] sm:$0xff]
        %v203 = vld [vmem:[%s157 + $0x78] sm:$0xff]
        %v204 = vperm.slane %v186, 0
        %v205 = vperm.slane %v187, 0
        %v206 = vmul.f32 %v204, %v188
        %v207 = vmul.f32 %v204, %v189
        %v208 = vmul.f32 %v205, %v188
        %v209 = vmul.f32 %v205, %v189
        %v210 = vperm.slane %v186, 1
        %v211 = vperm.slane %v187, 1
        %v212 = vmul.f32 %v210, %v190
        %v213 = vmul.f32 %v210, %v191
        %v214 = vmul.f32 %v211, %v190
        %v215 = vmul.f32 %v211, %v191
        %v216 = vadd.f32 %v206, %v212
        %v217 = vadd.f32 %v207, %v213
        %v218 = vadd.f32 %v208, %v214
        %v219 = vadd.f32 %v209, %v215
        %v220 = vperm.slane %v186, 2
        %v221 = vperm.slane %v187, 2
        %v222 = vmul.f32 %v220, %v192
        %v223 = vmul.f32 %v220, %v193
        %v224 = vmul.f32 %v221, %v192
        %v225 = vmul.f32 %v221, %v193
        %v226 = vadd.f32 %v216, %v222
        %v227 = vadd.f32 %v217, %v223
        %v228 = vadd.f32 %v218, %v224
        %v229 = vadd.f32 %v219, %v225
        %v230 = vperm.slane %v186, 3
        %v231 = vperm.slane %v187, 3
        %v232 = vmul.f32 %v230, %v194
        %v233 = vmul.f32 %v230, %v195
        %v234 = vmul.f32 %v231, %v194
        %v235 = vmul.f32 %v231, %v195
        %v236 = vadd.f32 %v226, %v232
        %v237 = vadd.f32 %v227, %v233
        %v238 = vadd.f32 %v228, %v234
        %v239 = vadd.f32 %v229, %v235
        %v240 = vperm.slane %v186, 4
        %v241 = vperm.slane %v187, 4
        %v242 = vmul.f32 %v240, %v196
        %v243 = vmul.f32 %v240, %v197
        %v244 = vmul.f32 %v241, %v196
        %v245 = vmul.f32 %v241, %v197
        %v246 = vadd.f32 %v236, %v242
        %v247 = vadd.f32 %v237, %v243
        %v248 = vadd.f32 %v238, %v244
        %v249 = vadd.f32 %v239, %v245
        %v250 = vperm.slane %v186, 5
        %v251 = vperm.slane %v187, 5
        %v252 = vmul.f32 %v250, %v198
        %v253 = vmul.f32 %v250, %v199
        %v254 = vmul.f32 %v251, %v198
        %v255 = vmul.f32 %v251, %v199
        %v256 = vadd.f32 %v246, %v252
        %v257 = vadd.f32 %v247, %v253
        %v258 = vadd.f32 %v248, %v254
        %v259 = vadd.f32 %v249, %v255
        %v260 = vperm.slane %v186, 6
        %v261 = vperm.slane %v187, 6
        %v262 = vmul.f32 %v260, %v200
        %v263 = vmul.f32 %v260, %v201
        %v264 = vmul.f32 %v261, %v200
        %v265 = vmul.f32 %v261, %v201
        %v266 = vadd.f32 %v256, %v262
        %v267 = vadd.f32 %v257, %v263
        %v268 = vadd.f32 %v258, %v264
        %v269 = vadd.f32 %v259, %v265
        %v270 = vperm.slane %v186, 7
        %v271 = vperm.slane %v187, 7
        %v272 = vmul.f32 %v270, %v202
        %v273 = vmul.f32 %v270, %v203
        %v274 = vmul.f32 %v271, %v202
        %v275 = vmul.f32 %v271, %v203
        %v276 = vadd.f32 %v266, %v272
        %v277 = vadd.f32 %v267, %v273
        %v278 = vadd.f32 %v268, %v274
        %v279 = vadd.f32 %v269, %v275
        %vm280 = vcmask 523264
        %281 = vst.msk [vmem:[#allocation2] sm:$0xff] %vm280, %v276
        %282 = vst.msk [vmem:[#allocation2 + $0x8] sm:$0xff] %vm280, %v277
        %283 = vst.msk [vmem:[#allocation2 + $0x10] sm:$0xff] %vm280, %v278
        %284 = vst.msk [vmem:[#allocation2 + $0x18] sm:$0xff] %vm280, %v279
        %v285 = vld [vmem:[#allocation2] sm:$0xff]
        %v286 = vld [vmem:[#allocation2 + $0x8] sm:$0xff]
        %v287 = vld [vmem:[#allocation2 + $0x10] sm:$0xff]
        %v288 = vld [vmem:[#allocation2 + $0x18] sm:$0xff]
        %v289 = vsel %vm280, %v285, 0.0
        %290 = vadd.xlane.f32.xlu0 %v289
        %v291 = vpop.xlane.xlu0 %290
        %v292 = vsel %vm280, %v286, 0.0
        %293 = vadd.xlane.f32.xlu0 %v292
        %v294 = vpop.xlane.xlu0 %293
        %v295 = vsel %vm280, %v287, 0.0
        %296 = vadd.xlane.f32.xlu0 %v295
        %v297 = vpop.xlane.xlu0 %296
        %v298 = vsel %vm280, %v288, 0.0
        %299 = vadd.xlane.f32.xlu0 %v298
        %v300 = vpop.xlane.xlu0 %299
        %v301 = vmul.f32 %v291, 0.015625
        %v302 = vmul.f32 %v294, 0.015625
        %v303 = vmul.f32 %v297, 0.015625
        %v304 = vmul.f32 %v300, 0.015625
        %v305 = vmul.f32 %v301, %v301
        %v306 = vmul.f32 %v302, %v302
        %v307 = vmul.f32 %v303, %v303
        %v308 = vmul.f32 %v304, %v304
        %v313 = vlaneseq
        %v314 = vand.u32 %v313, 127
        %v315 = vperm.slane %v305, %v314
        %v316 = vadd.s32 %v314, 4294967288
        %v317 = vperm.slane %v306, %v316
        %vm318 = vcmask 130112
        %v319 = vsel %vm318, %v317, %v315
        %v320 = vperm.slane %v307, %v314
        %v321 = vperm.slane %v308, %v316
        %v322 = vsel %vm318, %v321, %v320
        %vm323 = vcmask 1041409
        %v324 = vsel %vm323, %v322, %v319
        %vm326 = vcmask 123904
        %v327 = vsel %vm326, %v324, 0.0
        %328 = vadd.xlane.f32.xlu0 %v327
        %v329 = vpop.xlane.xlu0 %328
        %v331 = vperm.slane %v329, 0
        %v332 = vperm.slane %v329, 1
        %v335 = vmul.f32 %v301, %v331
        %v336 = vmul.f32 %v302, %v331
        %v337 = vmul.f32 %v303, %v332
        %v338 = vmul.f32 %v304, %v332
        %v339 = vadd.f32 %v329, 1.0
        %v341 = vperm.slane %v339, 0
        %v342 = vperm.slane %v339, 1
        %v345 = vrcp.pop %v341
        %v346 = vmul.f32 %v341, %v345
        %v347 = vsub.f32 1.0, %v346
        %v348 = vmul.f32 %v345, %v347
        %v349 = vadd.f32 %v345, %v348
        %vm350 = vweird.f32 %v341
        %vm351 = vweird.f32 %v345
        %vm352 = vmor %vm350, %vm351
        %v353 = vsel %vm352, %v345, %v349
        %v354 = vand.u32 2147483647, %v341
        %vm355 = vcmp.eq.f32.partialorder %v354, 8.507059e+37
        %v356 = vand.u32 %v341, 2147483648
        %v357 = vor.u32 1.1754944e-38, %v356
        %v358 = vsel %vm355, %v357, %v353
        %v359 = vmul.f32 %v335, %v358
        %v360 = vmul.f32 %v336, %v358
        %v361 = vrcp.pop %v342
        %v362 = vmul.f32 %v342, %v361
        %v363 = vsub.f32 1.0, %v362
        %v364 = vmul.f32 %v361, %v363
        %v365 = vadd.f32 %v361, %v364
        %vm366 = vweird.f32 %v342
        %vm367 = vweird.f32 %v361
        %vm368 = vmor %vm366, %vm367
        %v369 = vsel %vm368, %v361, %v365
        %v370 = vand.u32 2147483647, %v342
        %vm371 = vcmp.eq.f32.partialorder %v370, 8.507059e+37
        %v372 = vand.u32 %v342, 2147483648
        %v373 = vor.u32 1.1754944e-38, %v372
        %v374 = vsel %vm371, %v373, %v369
        %v375 = vmul.f32 %v337, %v374
        %v376 = vmul.f32 %v338, %v374
        %v377 = vrsqrt.pop %v329
        %v378 = vmul.f32 %v377, %v329
        %v379 = vmul.f32 %v378, %v377
        %v380 = vmul.f32 0.5, %v379
        %v381 = vsub.f32 1.5, %v380
        %v382 = vmul.f32 %v377, %v381
        %v383 = vmul.f32 %v329, %v382
        %vm384 = vcmp.eq.f32.partialorder %v329, inf
        %v385 = vsel %vm384, %v329, %v383
        %vm386 = vcmp.eq.f32.partialorder %v329, 0.0
        %v387 = vand.u32 %v329, 2147483648
        %v388 = vsel %vm386, %v387, %v385
        %v390 = vperm.slane %v388, 0
        %v391 = vperm.slane %v388, 1
        %v394 = vrcp.pop %v390
        %v395 = vmul.f32 %v390, %v394
        %v396 = vsub.f32 1.0, %v395
        %v397 = vmul.f32 %v394, %v396
        %v398 = vadd.f32 %v394, %v397
        %vm399 = vweird.f32 %v390
        %vm400 = vweird.f32 %v394
        %vm401 = vmor %vm399, %vm400
        %v402 = vsel %vm401, %v394, %v398
        %v403 = vand.u32 2147483647, %v390
        %vm404 = vcmp.eq.f32.partialorder %v403, 8.507059e+37
        %v405 = vand.u32 %v390, 2147483648
        %v406 = vor.u32 1.1754944e-38, %v405
        %v407 = vsel %vm404, %v406, %v402
        %v408 = vmul.f32 %v359, %v407
        %v409 = vmul.f32 %v360, %v407
        %v410 = vrcp.pop %v391
        %v411 = vmul.f32 %v391, %v410
        %v412 = vsub.f32 1.0, %v411
        %v413 = vmul.f32 %v410, %v412
        %v414 = vadd.f32 %v410, %v413
        %vm415 = vweird.f32 %v391
        %vm416 = vweird.f32 %v410
        %vm417 = vmor %vm415, %vm416
        %v418 = vsel %vm417, %v410, %v414
        %v419 = vand.u32 2147483647, %v391
        %vm420 = vcmp.eq.f32.partialorder %v419, 8.507059e+37
        %v421 = vand.u32 %v391, 2147483648
        %v422 = vor.u32 1.1754944e-38, %v421
        %v423 = vsel %vm420, %v422, %v418
        %v424 = vmul.f32 %v375, %v423
        %v425 = vmul.f32 %v376, %v423
        %427 = vset.pattern.permute.xlu0 0
        %428 = vperm.xlu0 %427, %v408
        %v429 = vpop.permute.xlu0 %428
        %432 = vset.pattern.permute.xlu0 0
        %433 = vperm.xlu0 %432, %v409
        %v434 = vpop.permute.xlu0 %433
        %437 = vset.pattern.permute.xlu0 0
        %438 = vperm.xlu0 %437, %v424
        %v439 = vpop.permute.xlu0 %438
        %442 = vset.pattern.permute.xlu0 0
        %443 = vperm.xlu0 %442, %v425
        %v444 = vpop.permute.xlu0 %443
        %v446 = vmul.f32 %v285, %v429
        %v447 = vmul.f32 %v286, %v434
        %v448 = vmul.f32 %v287, %v439
        %v449 = vmul.f32 %v288, %v444
        %v450 = vsel %vm280, %v446, 0.0
        %v451 = vsel %vm280, %v447, 0.0
        %v452 = vadd.f32 %v450, %v451
        %v453 = vrot.slane %v452, 4
        %v454 = vadd.f32 %v452, %v453
        %v455 = vrot.slane %v454, 2
        %v456 = vadd.f32 %v454, %v455
        %v457 = vrot.slane %v456, 1
        %v458 = vadd.f32 %v456, %v457
        %v459 = vsel %vm280, %v448, 0.0
        %v460 = vsel %vm280, %v449, 0.0
        %v461 = vadd.f32 %v459, %v460
        %v462 = vrot.slane %v461, 4
        %v463 = vadd.f32 %v461, %v462
        %v464 = vrot.slane %v463, 2
        %v465 = vadd.f32 %v463, %v464
        %v466 = vrot.slane %v465, 1
        %v467 = vadd.f32 %v465, %v466
        %v470 = vsel %vm323, %v467, %v458
        %vm472 = vcmask 517120
        %v473 = vsel %vm472, %v470, -inf
        %474 = vmax.xlane.f32.xlu0 %v473
        %v475 = vpop.xlane.xlu0 %474
        %v477 = vrot.slane %v475, 1
        %v480 = vsub.f32 %v458, %v475
        %v481 = vsub.f32 %v467, %v477
        %v482 = vmul.f32 %v480, 1.442695
        %v483 = vpow.pop %v482
        %v484 = vmul.f32 %v481, 1.442695
        %v485 = vpow.pop %v484
        %v488 = vrot.slane %v485, 7
        %v489 = vsel %vm323, %v488, %v483
        %v491 = vsel %vm472, %v489, 0.0
        %492 = vadd.xlane.f32.xlu0 %v491
        %v493 = vpop.xlane.xlu0 %492
        %v495 = vrot.slane %v493, 1
        %v498 = vrcp.pop %v493
        %v499 = vmul.f32 %v493, %v498
        %v500 = vsub.f32 1.0, %v499
        %v501 = vmul.f32 %v498, %v500
        %v502 = vadd.f32 %v498, %v501
        %vm503 = vweird.f32 %v493
        %vm504 = vweird.f32 %v498
        %vm505 = vmor %vm503, %vm504
        %v506 = vsel %vm505, %v498, %v502
        %v507 = vand.u32 2147483647, %v493
        %vm508 = vcmp.eq.f32.partialorder %v507, 8.507059e+37
        %v509 = vand.u32 %v493, 2147483648
        %v510 = vor.u32 1.1754944e-38, %v509
        %v511 = vsel %vm508, %v510, %v506
        %v512 = vmul.f32 %v483, %v511
        %v513 = vrcp.pop %v495
        %v514 = vmul.f32 %v495, %v513
        %v515 = vsub.f32 1.0, %v514
        %v516 = vmul.f32 %v513, %v515
        %v517 = vadd.f32 %v513, %v516
        %vm518 = vweird.f32 %v495
        %vm519 = vweird.f32 %v513
        %vm520 = vmor %vm518, %vm519
        %v521 = vsel %vm520, %v513, %v517
        %v522 = vand.u32 2147483647, %v495
        %vm523 = vcmp.eq.f32.partialorder %v522, 8.507059e+37
        %v524 = vand.u32 %v495, 2147483648
        %v525 = vor.u32 1.1754944e-38, %v524
        %v526 = vsel %vm523, %v525, %v521
        %v527 = vmul.f32 %v485, %v526
        %v528 = vperm.slane %v512, 0
        %v529 = vperm.slane %v527, 0
        %v530 = vmul.f32 %v528, %v285
        %v531 = vmul.f32 %v528, %v286
        %v532 = vmul.f32 %v529, %v287
        %v533 = vmul.f32 %v529, %v288
        %v534 = vsel %vm280, %v530, 0.0
        %535 = vadd.xlane.f32.xlu0 %v534
        %v536 = vpop.xlane.xlu0 %535
        %v537 = vsel %vm280, %v531, 0.0
        %538 = vadd.xlane.f32.xlu0 %v537
        %v539 = vpop.xlane.xlu0 %538
        %v540 = vsel %vm280, %v532, 0.0
        %541 = vadd.xlane.f32.xlu0 %v540
        %v542 = vpop.xlane.xlu0 %541
        %v543 = vsel %vm280, %v533, 0.0
        %544 = vadd.xlane.f32.xlu0 %v543
        %v545 = vpop.xlane.xlu0 %544
        %v546 = vmul.f32 %v536, %v536
        %v547 = vmul.f32 %v539, %v539
        %v548 = vmul.f32 %v542, %v542
        %v549 = vmul.f32 %v545, %v545
        %v554 = vperm.slane %v546, %v314
        %v555 = vperm.slane %v547, %v316
        %v556 = vsel %vm318, %v555, %v554
        %v557 = vperm.slane %v548, %v314
        %v558 = vperm.slane %v549, %v316
        %v559 = vsel %vm318, %v558, %v557
        %v560 = vsel %vm323, %v559, %v556
        %v562 = vsel %vm326, %v560, 0.0
        %563 = vadd.xlane.f32.xlu0 %v562
        %v564 = vpop.xlane.xlu0 %563
        %v566 = vperm.slane %v564, 0
        %v567 = vperm.slane %v564, 1
        %v570 = vmul.f32 %v536, %v566
        %v571 = vmul.f32 %v539, %v566
        %v572 = vmul.f32 %v542, %v567
        %v573 = vmul.f32 %v545, %v567
        %v574 = vadd.f32 %v564, 1.0
        %v576 = vperm.slane %v574, 0
        %v577 = vperm.slane %v574, 1
        %v580 = vrcp.pop %v576
        %v581 = vmul.f32 %v576, %v580
        %v582 = vsub.f32 1.0, %v581
        %v583 = vmul.f32 %v580, %v582
        %v584 = vadd.f32 %v580, %v583
        %vm585 = vweird.f32 %v576
        %vm586 = vweird.f32 %v580
        %vm587 = vmor %vm585, %vm586
        %v588 = vsel %vm587, %v580, %v584
        %v589 = vand.u32 2147483647, %v576
        %vm590 = vcmp.eq.f32.partialorder %v589, 8.507059e+37
        %v591 = vand.u32 %v576, 2147483648
        %v592 = vor.u32 1.1754944e-38, %v591
        %v593 = vsel %vm590, %v592, %v588
        %v594 = vmul.f32 %v570, %v593
        %v595 = vmul.f32 %v571, %v593
        %v596 = vrcp.pop %v577
        %v597 = vmul.f32 %v577, %v596
        %v598 = vsub.f32 1.0, %v597
        %v599 = vmul.f32 %v596, %v598
        %v600 = vadd.f32 %v596, %v599
        %vm601 = vweird.f32 %v577
        %vm602 = vweird.f32 %v596
        %vm603 = vmor %vm601, %vm602
        %v604 = vsel %vm603, %v596, %v600
        %v605 = vand.u32 2147483647, %v577
        %vm606 = vcmp.eq.f32.partialorder %v605, 8.507059e+37
        %v607 = vand.u32 %v577, 2147483648
        %v608 = vor.u32 1.1754944e-38, %v607
        %v609 = vsel %vm606, %v608, %v604
        %v610 = vmul.f32 %v572, %v609
        %v611 = vmul.f32 %v573, %v609
        %v612 = vrsqrt.pop %v564
        %v613 = vmul.f32 %v612, %v564
        %v614 = vmul.f32 %v613, %v612
        %v615 = vmul.f32 0.5, %v614
        %v616 = vsub.f32 1.5, %v615
        %v617 = vmul.f32 %v612, %v616
        %v618 = vmul.f32 %v564, %v617
        %vm619 = vcmp.eq.f32.partialorder %v564, inf
        %v620 = vsel %vm619, %v564, %v618
        %vm621 = vcmp.eq.f32.partialorder %v564, 0.0
        %v622 = vand.u32 %v564, 2147483648
        %v623 = vsel %vm621, %v622, %v620
        %v625 = vperm.slane %v623, 0
        %v626 = vperm.slane %v623, 1
        %v629 = vrcp.pop %v625
        %v630 = vmul.f32 %v625, %v629
        %v631 = vsub.f32 1.0, %v630
        %v632 = vmul.f32 %v629, %v631
        %v633 = vadd.f32 %v629, %v632
        %vm634 = vweird.f32 %v625
        %vm635 = vweird.f32 %v629
        %vm636 = vmor %vm634, %vm635
        %v637 = vsel %vm636, %v629, %v633
        %v638 = vand.u32 2147483647, %v625
        %vm639 = vcmp.eq.f32.partialorder %v638, 8.507059e+37
        %v640 = vand.u32 %v625, 2147483648
        %v641 = vor.u32 1.1754944e-38, %v640
        %v642 = vsel %vm639, %v641, %v637
        %v643 = vmul.f32 %v594, %v642
        %v644 = vmul.f32 %v595, %v642
        %v645 = vrcp.pop %v626
        %v646 = vmul.f32 %v626, %v645
        %v647 = vsub.f32 1.0, %v646
        %v648 = vmul.f32 %v645, %v647
        %v649 = vadd.f32 %v645, %v648
        %vm650 = vweird.f32 %v626
        %vm651 = vweird.f32 %v645
        %vm652 = vmor %vm650, %vm651
        %v653 = vsel %vm652, %v645, %v649
        %v654 = vand.u32 2147483647, %v626
        %vm655 = vcmp.eq.f32.partialorder %v654, 8.507059e+37
        %v656 = vand.u32 %v626, 2147483648
        %v657 = vor.u32 1.1754944e-38, %v656
        %v658 = vsel %vm655, %v657, %v653
        %v659 = vmul.f32 %v610, %v658
        %v660 = vmul.f32 %v611, %v658
        %662 = vset.pattern.permute.xlu0 0
        %663 = vperm.xlu0 %662, %v643
        %v664 = vpop.permute.xlu0 %663
        %667 = vset.pattern.permute.xlu0 0
        %668 = vperm.xlu0 %667, %v644
        %v669 = vpop.permute.xlu0 %668
        %672 = vset.pattern.permute.xlu0 0
        %673 = vperm.xlu0 %672, %v659
        %v674 = vpop.permute.xlu0 %673
        %677 = vset.pattern.permute.xlu0 0
        %678 = vperm.xlu0 %677, %v660
        %v679 = vpop.permute.xlu0 %678
        %v681 = vmul.f32 %v285, %v664
        %v682 = vmul.f32 %v286, %v669
        %v683 = vmul.f32 %v287, %v674
        %v684 = vmul.f32 %v288, %v679
        %v685 = vsel %vm280, %v681, 0.0
        %v686 = vsel %vm280, %v682, 0.0
        %v687 = vadd.f32 %v685, %v686
        %v688 = vrot.slane %v687, 4
        %v689 = vadd.f32 %v687, %v688
        %v690 = vrot.slane %v689, 2
        %v691 = vadd.f32 %v689, %v690
        %v692 = vrot.slane %v691, 1
        %v693 = vadd.f32 %v691, %v692
        %v694 = vsel %vm280, %v683, 0.0
        %v695 = vsel %vm280, %v684, 0.0
        %v696 = vadd.f32 %v694, %v695
        %v697 = vrot.slane %v696, 4
        %v698 = vadd.f32 %v696, %v697
        %v699 = vrot.slane %v698, 2
        %v700 = vadd.f32 %v698, %v699
        %v701 = vrot.slane %v700, 1
        %v702 = vadd.f32 %v700, %v701
        %v703 = vadd.f32 %v458, %v693
        %v704 = vadd.f32 %v467, %v702
        %v707 = vsel %vm323, %v704, %v703
        %v709 = vsel %vm472, %v707, -inf
        %710 = vmax.xlane.f32.xlu0 %v709
        %v711 = vpop.xlane.xlu0 %710
        %v713 = vrot.slane %v711, 1
        %v716 = vsub.f32 %v703, %v711
        %v717 = vsub.f32 %v704, %v713
        %v718 = vmul.f32 %v716, 1.442695
        %v719 = vpow.pop %v718
        %v720 = vmul.f32 %v717, 1.442695
        %v721 = vpow.pop %v720
        %v724 = vrot.slane %v721, 7
        %v725 = vsel %vm323, %v724, %v719
        %v727 = vsel %vm472, %v725, 0.0
        %728 = vadd.xlane.f32.xlu0 %v727
        %v729 = vpop.xlane.xlu0 %728
        %v731 = vrot.slane %v729, 1
        %v734 = vrcp.pop %v729
        %v735 = vmul.f32 %v729, %v734
        %v736 = vsub.f32 1.0, %v735
        %v737 = vmul.f32 %v734, %v736
        %v738 = vadd.f32 %v734, %v737
        %vm739 = vweird.f32 %v729
        %vm740 = vweird.f32 %v734
        %vm741 = vmor %vm739, %vm740
        %v742 = vsel %vm741, %v734, %v738
        %v743 = vand.u32 2147483647, %v729
        %vm744 = vcmp.eq.f32.partialorder %v743, 8.507059e+37
        %v745 = vand.u32 %v729, 2147483648
        %v746 = vor.u32 1.1754944e-38, %v745
        %v747 = vsel %vm744, %v746, %v742
        %v748 = vmul.f32 %v719, %v747
        %v749 = vrcp.pop %v731
        %v750 = vmul.f32 %v731, %v749
        %v751 = vsub.f32 1.0, %v750
        %v752 = vmul.f32 %v749, %v751
        %v753 = vadd.f32 %v749, %v752
        %vm754 = vweird.f32 %v731
        %vm755 = vweird.f32 %v749
        %vm756 = vmor %vm754, %vm755
        %v757 = vsel %vm756, %v749, %v753
        %v758 = vand.u32 2147483647, %v731
        %vm759 = vcmp.eq.f32.partialorder %v758, 8.507059e+37
        %v760 = vand.u32 %v731, 2147483648
        %v761 = vor.u32 1.1754944e-38, %v760
        %v762 = vsel %vm759, %v761, %v757
        %v763 = vmul.f32 %v721, %v762
        %v764 = vperm.slane %v748, 0
        %v765 = vperm.slane %v763, 0
        %v766 = vmul.f32 %v764, %v285
        %v767 = vmul.f32 %v764, %v286
        %v768 = vmul.f32 %v765, %v287
        %v769 = vmul.f32 %v765, %v288
        %v770 = vsel %vm280, %v766, 0.0
        %771 = vadd.xlane.f32.xlu0 %v770
        %v772 = vpop.xlane.xlu0 %771
        %v773 = vsel %vm280, %v767, 0.0
        %774 = vadd.xlane.f32.xlu0 %v773
        %v775 = vpop.xlane.xlu0 %774
        %v776 = vsel %vm280, %v768, 0.0
        %777 = vadd.xlane.f32.xlu0 %v776
        %v778 = vpop.xlane.xlu0 %777
        %v779 = vsel %vm280, %v769, 0.0
        %780 = vadd.xlane.f32.xlu0 %v779
        %v781 = vpop.xlane.xlu0 %780
        %v782 = vmul.f32 %v772, %v772
        %v783 = vmul.f32 %v775, %v775
        %v784 = vmul.f32 %v778, %v778
        %v785 = vmul.f32 %v781, %v781
        %v790 = vperm.slane %v782, %v314
        %v791 = vperm.slane %v783, %v316
        %v792 = vsel %vm318, %v791, %v790
        %v793 = vperm.slane %v784, %v314
        %v794 = vperm.slane %v785, %v316
        %v795 = vsel %vm318, %v794, %v793
        %v796 = vsel %vm323, %v795, %v792
        %v798 = vsel %vm326, %v796, 0.0
        %799 = vadd.xlane.f32.xlu0 %v798
        %v800 = vpop.xlane.xlu0 %799
        %v802 = vperm.slane %v800, 0
        %v803 = vperm.slane %v800, 1
        %v806 = vmul.f32 %v772, %v802
        %v807 = vmul.f32 %v775, %v802
        %v808 = vmul.f32 %v778, %v803
        %v809 = vmul.f32 %v781, %v803
        %v810 = vadd.f32 %v800, 1.0
        %v812 = vperm.slane %v810, 0
        %v813 = vperm.slane %v810, 1
        %v816 = vrcp.pop %v812
        %v817 = vmul.f32 %v812, %v816
        %v818 = vsub.f32 1.0, %v817
        %v819 = vmul.f32 %v816, %v818
        %v820 = vadd.f32 %v816, %v819
        %vm821 = vweird.f32 %v812
        %vm822 = vweird.f32 %v816
        %vm823 = vmor %vm821, %vm822
        %v824 = vsel %vm823, %v816, %v820
        %v825 = vand.u32 2147483647, %v812
        %vm826 = vcmp.eq.f32.partialorder %v825, 8.507059e+37
        %v827 = vand.u32 %v812, 2147483648
        %v828 = vor.u32 1.1754944e-38, %v827
        %v829 = vsel %vm826, %v828, %v824
        %v830 = vmul.f32 %v806, %v829
        %v831 = vmul.f32 %v807, %v829
        %v832 = vrcp.pop %v813
        %v833 = vmul.f32 %v813, %v832
        %v834 = vsub.f32 1.0, %v833
        %v835 = vmul.f32 %v832, %v834
        %v836 = vadd.f32 %v832, %v835
        %vm837 = vweird.f32 %v813
        %vm838 = vweird.f32 %v832
        %vm839 = vmor %vm837, %vm838
        %v840 = vsel %vm839, %v832, %v836
        %v841 = vand.u32 2147483647, %v813
        %vm842 = vcmp.eq.f32.partialorder %v841, 8.507059e+37
        %v843 = vand.u32 %v813, 2147483648
        %v844 = vor.u32 1.1754944e-38, %v843
        %v845 = vsel %vm842, %v844, %v840
        %v846 = vmul.f32 %v808, %v845
        %v847 = vmul.f32 %v809, %v845
        %v848 = vrsqrt.pop %v800
        %v849 = vmul.f32 %v848, %v800
        %v850 = vmul.f32 %v849, %v848
        %v851 = vmul.f32 0.5, %v850
        %v852 = vsub.f32 1.5, %v851
        %v853 = vmul.f32 %v848, %v852
        %v854 = vmul.f32 %v800, %v853
        %vm855 = vcmp.eq.f32.partialorder %v800, inf
        %v856 = vsel %vm855, %v800, %v854
        %vm857 = vcmp.eq.f32.partialorder %v800, 0.0
        %v858 = vand.u32 %v800, 2147483648
        %v859 = vsel %vm857, %v858, %v856
        %v861 = vperm.slane %v859, 0
        %v862 = vperm.slane %v859, 1
        %v865 = vrcp.pop %v861
        %v866 = vmul.f32 %v861, %v865
        %v867 = vsub.f32 1.0, %v866
        %v868 = vmul.f32 %v865, %v867
        %v869 = vadd.f32 %v865, %v868
        %vm870 = vweird.f32 %v861
        %vm871 = vweird.f32 %v865
        %vm872 = vmor %vm870, %vm871
        %v873 = vsel %vm872, %v865, %v869
        %v874 = vand.u32 2147483647, %v861
        %vm875 = vcmp.eq.f32.partialorder %v874, 8.507059e+37
        %v876 = vand.u32 %v861, 2147483648
        %v877 = vor.u32 1.1754944e-38, %v876
        %v878 = vsel %vm875, %v877, %v873
        %v879 = vmul.f32 %v830, %v878
        %v880 = vmul.f32 %v831, %v878
        %v881 = vrcp.pop %v862
        %v882 = vmul.f32 %v862, %v881
        %v883 = vsub.f32 1.0, %v882
        %v884 = vmul.f32 %v881, %v883
        %v885 = vadd.f32 %v881, %v884
        %vm886 = vweird.f32 %v862
        %vm887 = vweird.f32 %v881
        %vm888 = vmor %vm886, %vm887
        %v889 = vsel %vm888, %v881, %v885
        %v890 = vand.u32 2147483647, %v862
        %vm891 = vcmp.eq.f32.partialorder %v890, 8.507059e+37
        %v892 = vand.u32 %v862, 2147483648
        %v893 = vor.u32 1.1754944e-38, %v892
        %v894 = vsel %vm891, %v893, %v889
        %v895 = vmul.f32 %v846, %v894
        %v896 = vmul.f32 %v847, %v894
        %vm897 = vcmp.ge.f32.partialorder %v879, 0.0
        %vm898 = vcmp.ge.f32.partialorder %v880, 0.0
        %vm899 = vcmp.ge.f32.partialorder %v895, 0.0
        %vm900 = vcmp.ge.f32.partialorder %v896, 0.0
        %v901 = vmul.f32 %v879, 0.05
        %v902 = vmul.f32 %v880, 0.05
        %v903 = vmul.f32 %v895, 0.05
        %v904 = vmul.f32 %v896, 0.05
        %v905 = vsel %vm897, %v879, %v901
        %v906 = vsel %vm898, %v880, %v902
        %v907 = vsel %vm899, %v895, %v903
        %v908 = vsel %vm900, %v896, %v904
        %v909 = vsub.f32 %v879, 1.0
        %v910 = vsub.f32 %v880, 1.0
        %v911 = vsub.f32 %v895, 1.0
        %v912 = vsub.f32 %v896, 1.0
        %v913 = vmax.f32 %v909, 0.0
        %v914 = vmax.f32 %v910, 0.0
        %v915 = vmax.f32 %v911, 0.0
        %v916 = vmax.f32 %v912, 0.0
        %v917 = vmul.f32 %v913, 0.95
        %v918 = vmul.f32 %v914, 0.95
        %v919 = vmul.f32 %v915, 0.95
        %v920 = vmul.f32 %v916, 0.95
        %v921 = vsub.f32 %v905, %v917
        %v922 = vsub.f32 %v906, %v918
        %v923 = vsub.f32 %v907, %v919
        %v924 = vsub.f32 %v908, %v920
        %929 = vset.pattern.permute.xlu0 0
        %930 = vperm.xlu0 %929, %v921
        %v931 = vpop.permute.xlu0 %930
        %932 = vset.pattern.permute.xlu0 0
        %933 = vperm.xlu0 %932, %v922
        %v934 = vpop.permute.xlu0 %933
        %935 = vset.pattern.permute.xlu0 0
        %936 = vperm.xlu0 %935, %v923
        %v937 = vpop.permute.xlu0 %936
        %938 = vset.pattern.permute.xlu0 0
        %939 = vperm.xlu0 %938, %v924
        %v940 = vpop.permute.xlu0 %939
        %v941 = vperm.slane %v931, %v314
        %v942 = vperm.slane %v934, %v316
        %v943 = vsel %vm318, %v942, %v941
        %v944 = vperm.slane %v937, %v314
        %v945 = vperm.slane %v940, %v316
        %v946 = vsel %vm318, %v945, %v944
        %v947 = vsel %vm323, %v946, %v943
        %949 = vst.msk [vmem:[%s184] sm:$0x3] %vm326, %v947
        %s950 = scalar_lea.vmem %s157, 128 [#allocation5]
        %v951 = vld [vmem:[%s950] sm:$0xff]
        %v952 = vld [vmem:[%s950 + $0x8] sm:$0xff]
        %v953 = vld [vmem:[%s950 + $0x10] sm:$0xff]
        %v954 = vld [vmem:[%s950 + $0x18] sm:$0xff]
        %v955 = vld [vmem:[%s950 + $0x20] sm:$0xff]
        %v956 = vld [vmem:[%s950 + $0x28] sm:$0xff]
        %v957 = vld [vmem:[%s950 + $0x30] sm:$0xff]
        %v958 = vld [vmem:[%s950 + $0x38] sm:$0xff]
        %v959 = vld [vmem:[%s950 + $0x40] sm:$0xff]
        %v960 = vld [vmem:[%s950 + $0x48] sm:$0xff]
        %v961 = vld [vmem:[%s950 + $0x50] sm:$0xff]
        %v962 = vld [vmem:[%s950 + $0x58] sm:$0xff]
        %v963 = vld [vmem:[%s950 + $0x60] sm:$0xff]
        %v964 = vld [vmem:[%s950 + $0x68] sm:$0xff]
        %v965 = vld [vmem:[%s950 + $0x70] sm:$0xff]
        %v966 = vld [vmem:[%s950 + $0x78] sm:$0xff]
        %v967 = vmul.f32 %v204, %v951
        %v968 = vmul.f32 %v204, %v952
        %v969 = vmul.f32 %v205, %v951
        %v970 = vmul.f32 %v205, %v952
        %v971 = vmul.f32 %v210, %v953
        %v972 = vmul.f32 %v210, %v954
        %v973 = vmul.f32 %v211, %v953
        %v974 = vmul.f32 %v211, %v954
        %v975 = vadd.f32 %v967, %v971
        %v976 = vadd.f32 %v968, %v972
        %v977 = vadd.f32 %v969, %v973
        %v978 = vadd.f32 %v970, %v974
        %v979 = vmul.f32 %v220, %v955
        %v980 = vmul.f32 %v220, %v956
        %v981 = vmul.f32 %v221, %v955
        %v982 = vmul.f32 %v221, %v956
        %v983 = vadd.f32 %v975, %v979
        %v984 = vadd.f32 %v976, %v980
        %v985 = vadd.f32 %v977, %v981
        %v986 = vadd.f32 %v978, %v982
        %v987 = vmul.f32 %v230, %v957
        %v988 = vmul.f32 %v230, %v958
        %v989 = vmul.f32 %v231, %v957
        %v990 = vmul.f32 %v231, %v958
        %v991 = vadd.f32 %v983, %v987
        %v992 = vadd.f32 %v984, %v988
        %v993 = vadd.f32 %v985, %v989
        %v994 = vadd.f32 %v986, %v990
        %v995 = vmul.f32 %v240, %v959
        %v996 = vmul.f32 %v240, %v960
        %v997 = vmul.f32 %v241, %v959
        %v998 = vmul.f32 %v241, %v960
        %v999 = vadd.f32 %v991, %v995
        %v1000 = vadd.f32 %v992, %v996
        %v1001 = vadd.f32 %v993, %v997
        %v1002 = vadd.f32 %v994, %v998
        %v1003 = vmul.f32 %v250, %v961
        %v1004 = vmul.f32 %v250, %v962
        %v1005 = vmul.f32 %v251, %v961
        %v1006 = vmul.f32 %v251, %v962
        %v1007 = vadd.f32 %v999, %v1003
        %v1008 = vadd.f32 %v1000, %v1004
        %v1009 = vadd.f32 %v1001, %v1005
        %v1010 = vadd.f32 %v1002, %v1006
        %v1011 = vmul.f32 %v260, %v963
        %v1012 = vmul.f32 %v260, %v964
        %v1013 = vmul.f32 %v261, %v963
        %v1014 = vmul.f32 %v261, %v964
        %v1015 = vadd.f32 %v1007, %v1011
        %v1016 = vadd.f32 %v1008, %v1012
        %v1017 = vadd.f32 %v1009, %v1013
        %v1018 = vadd.f32 %v1010, %v1014
        %v1019 = vmul.f32 %v270, %v965
        %v1020 = vmul.f32 %v270, %v966
        %v1021 = vmul.f32 %v271, %v965
        %v1022 = vmul.f32 %v271, %v966
        %v1023 = vadd.f32 %v1015, %v1019
        %v1024 = vadd.f32 %v1016, %v1020
        %v1025 = vadd.f32 %v1017, %v1021
        %v1026 = vadd.f32 %v1018, %v1022
        %1027 = vst.msk [vmem:[#allocation2] sm:$0xff] %vm280, %v1023
        %1028 = vst.msk [vmem:[#allocation2 + $0x8] sm:$0xff] %vm280, %v1024
        %1029 = vst.msk [vmem:[#allocation2 + $0x10] sm:$0xff] %vm280, %v1025
        %1030 = vst.msk [vmem:[#allocation2 + $0x18] sm:$0xff] %vm280, %v1026
        %v1031 = vld [vmem:[#allocation2] sm:$0xff]
        %v1032 = vld [vmem:[#allocation2 + $0x8] sm:$0xff]
        %v1033 = vld [vmem:[#allocation2 + $0x10] sm:$0xff]
        %v1034 = vld [vmem:[#allocation2 + $0x18] sm:$0xff]
        %v1035 = vsel %vm280, %v1031, 0.0
        %1036 = vadd.xlane.f32.xlu0 %v1035
        %v1037 = vpop.xlane.xlu0 %1036
        %v1038 = vsel %vm280, %v1032, 0.0
        %1039 = vadd.xlane.f32.xlu0 %v1038
        %v1040 = vpop.xlane.xlu0 %1039
        %v1041 = vsel %vm280, %v1033, 0.0
        %1042 = vadd.xlane.f32.xlu0 %v1041
        %v1043 = vpop.xlane.xlu0 %1042
        %v1044 = vsel %vm280, %v1034, 0.0
        %1045 = vadd.xlane.f32.xlu0 %v1044
        %v1046 = vpop.xlane.xlu0 %1045
        %v1047 = vmul.f32 %v1037, 0.015625
        %v1048 = vmul.f32 %v1040, 0.015625
        %v1049 = vmul.f32 %v1043, 0.015625
        %v1050 = vmul.f32 %v1046, 0.015625
        %v1051 = vmul.f32 %v1047, %v1047
        %v1052 = vmul.f32 %v1048, %v1048
        %v1053 = vmul.f32 %v1049, %v1049
        %v1054 = vmul.f32 %v1050, %v1050
        %v1059 = vperm.slane %v1051, %v314
        %v1060 = vperm.slane %v1052, %v316
        %v1061 = vsel %vm318, %v1060, %v1059
        %v1062 = vperm.slane %v1053, %v314
        %v1063 = vperm.slane %v1054, %v316
        %v1064 = vsel %vm318, %v1063, %v1062
        %v1065 = vsel %vm323, %v1064, %v1061
        %v1067 = vsel %vm326, %v1065, 0.0
        %1068 = vadd.xlane.f32.xlu0 %v1067
        %v1069 = vpop.xlane.xlu0 %1068
        %v1071 = vperm.slane %v1069, 0
        %v1072 = vperm.slane %v1069, 1
        %v1075 = vmul.f32 %v1047, %v1071
        %v1076 = vmul.f32 %v1048, %v1071
        %v1077 = vmul.f32 %v1049, %v1072
        %v1078 = vmul.f32 %v1050, %v1072
        %v1079 = vadd.f32 %v1069, 1.0
        %v1081 = vperm.slane %v1079, 0
        %v1082 = vperm.slane %v1079, 1
        %v1085 = vrcp.pop %v1081
        %v1086 = vmul.f32 %v1081, %v1085
        %v1087 = vsub.f32 1.0, %v1086
        %v1088 = vmul.f32 %v1085, %v1087
        %v1089 = vadd.f32 %v1085, %v1088
        %vm1090 = vweird.f32 %v1081
        %vm1091 = vweird.f32 %v1085
        %vm1092 = vmor %vm1090, %vm1091
        %v1093 = vsel %vm1092, %v1085, %v1089
        %v1094 = vand.u32 2147483647, %v1081
        %vm1095 = vcmp.eq.f32.partialorder %v1094, 8.507059e+37
        %v1096 = vand.u32 %v1081, 2147483648
        %v1097 = vor.u32 1.1754944e-38, %v1096
        %v1098 = vsel %vm1095, %v1097, %v1093
        %v1099 = vmul.f32 %v1075, %v1098
        %v1100 = vmul.f32 %v1076, %v1098
        %v1101 = vrcp.pop %v1082
        %v1102 = vmul.f32 %v1082, %v1101
        %v1103 = vsub.f32 1.0, %v1102
        %v1104 = vmul.f32 %v1101, %v1103
        %v1105 = vadd.f32 %v1101, %v1104
        %vm1106 = vweird.f32 %v1082
        %vm1107 = vweird.f32 %v1101
        %vm1108 = vmor %vm1106, %vm1107
        %v1109 = vsel %vm1108, %v1101, %v1105
        %v1110 = vand.u32 2147483647, %v1082
        %vm1111 = vcmp.eq.f32.partialorder %v1110, 8.507059e+37
        %v1112 = vand.u32 %v1082, 2147483648
        %v1113 = vor.u32 1.1754944e-38, %v1112
        %v1114 = vsel %vm1111, %v1113, %v1109
        %v1115 = vmul.f32 %v1077, %v1114
        %v1116 = vmul.f32 %v1078, %v1114
        %v1117 = vrsqrt.pop %v1069
        %v1118 = vmul.f32 %v1117, %v1069
        %v1119 = vmul.f32 %v1118, %v1117
        %v1120 = vmul.f32 0.5, %v1119
        %v1121 = vsub.f32 1.5, %v1120
        %v1122 = vmul.f32 %v1117, %v1121
        %v1123 = vmul.f32 %v1069, %v1122
        %vm1124 = vcmp.eq.f32.partialorder %v1069, inf
        %v1125 = vsel %vm1124, %v1069, %v1123
        %vm1126 = vcmp.eq.f32.partialorder %v1069, 0.0
        %v1127 = vand.u32 %v1069, 2147483648
        %v1128 = vsel %vm1126, %v1127, %v1125
        %v1130 = vperm.slane %v1128, 0
        %v1131 = vperm.slane %v1128, 1
        %v1134 = vrcp.pop %v1130
        %v1135 = vmul.f32 %v1130, %v1134
        %v1136 = vsub.f32 1.0, %v1135
        %v1137 = vmul.f32 %v1134, %v1136
        %v1138 = vadd.f32 %v1134, %v1137
        %vm1139 = vweird.f32 %v1130
        %vm1140 = vweird.f32 %v1134
        %vm1141 = vmor %vm1139, %vm1140
        %v1142 = vsel %vm1141, %v1134, %v1138
        %v1143 = vand.u32 2147483647, %v1130
        %vm1144 = vcmp.eq.f32.partialorder %v1143, 8.507059e+37
        %v1145 = vand.u32 %v1130, 2147483648
        %v1146 = vor.u32 1.1754944e-38, %v1145
        %v1147 = vsel %vm1144, %v1146, %v1142
        %v1148 = vmul.f32 %v1099, %v1147
        %v1149 = vmul.f32 %v1100, %v1147
        %v1150 = vrcp.pop %v1131
        %v1151 = vmul.f32 %v1131, %v1150
        %v1152 = vsub.f32 1.0, %v1151
        %v1153 = vmul.f32 %v1150, %v1152
        %v1154 = vadd.f32 %v1150, %v1153
        %vm1155 = vweird.f32 %v1131
        %vm1156 = vweird.f32 %v1150
        %vm1157 = vmor %vm1155, %vm1156
        %v1158 = vsel %vm1157, %v1150, %v1154
        %v1159 = vand.u32 2147483647, %v1131
        %vm1160 = vcmp.eq.f32.partialorder %v1159, 8.507059e+37
        %v1161 = vand.u32 %v1131, 2147483648
        %v1162 = vor.u32 1.1754944e-38, %v1161
        %v1163 = vsel %vm1160, %v1162, %v1158
        %v1164 = vmul.f32 %v1115, %v1163
        %v1165 = vmul.f32 %v1116, %v1163
        %1167 = vset.pattern.permute.xlu0 0
        %1168 = vperm.xlu0 %1167, %v1148
        %v1169 = vpop.permute.xlu0 %1168
        %1172 = vset.pattern.permute.xlu0 0
        %1173 = vperm.xlu0 %1172, %v1149
        %v1174 = vpop.permute.xlu0 %1173
        %1177 = vset.pattern.permute.xlu0 0
        %1178 = vperm.xlu0 %1177, %v1164
        %v1179 = vpop.permute.xlu0 %1178
        %1182 = vset.pattern.permute.xlu0 0
        %1183 = vperm.xlu0 %1182, %v1165
        %v1184 = vpop.permute.xlu0 %1183
        %v1186 = vmul.f32 %v1031, %v1169
        %v1187 = vmul.f32 %v1032, %v1174
        %v1188 = vmul.f32 %v1033, %v1179
        %v1189 = vmul.f32 %v1034, %v1184
        %v1190 = vsel %vm280, %v1186, 0.0
        %v1191 = vsel %vm280, %v1187, 0.0
        %v1192 = vadd.f32 %v1190, %v1191
        %v1193 = vrot.slane %v1192, 4
        %v1194 = vadd.f32 %v1192, %v1193
        %v1195 = vrot.slane %v1194, 2
        %v1196 = vadd.f32 %v1194, %v1195
        %v1197 = vrot.slane %v1196, 1
        %v1198 = vadd.f32 %v1196, %v1197
        %v1199 = vsel %vm280, %v1188, 0.0
        %v1200 = vsel %vm280, %v1189, 0.0
        %v1201 = vadd.f32 %v1199, %v1200
        %v1202 = vrot.slane %v1201, 4
        %v1203 = vadd.f32 %v1201, %v1202
        %v1204 = vrot.slane %v1203, 2
        %v1205 = vadd.f32 %v1203, %v1204
        %v1206 = vrot.slane %v1205, 1
        %v1207 = vadd.f32 %v1205, %v1206
        %v1210 = vsel %vm323, %v1207, %v1198
        %v1212 = vsel %vm472, %v1210, -inf
        %1213 = vmax.xlane.f32.xlu0 %v1212
        %v1214 = vpop.xlane.xlu0 %1213
        %v1216 = vrot.slane %v1214, 1
        %v1219 = vsub.f32 %v1198, %v1214
        %v1220 = vsub.f32 %v1207, %v1216
        %v1221 = vmul.f32 %v1219, 1.442695
        %v1222 = vpow.pop %v1221
        %v1223 = vmul.f32 %v1220, 1.442695
        %v1224 = vpow.pop %v1223
        %v1227 = vrot.slane %v1224, 7
        %v1228 = vsel %vm323, %v1227, %v1222
        %v1230 = vsel %vm472, %v1228, 0.0
        %1231 = vadd.xlane.f32.xlu0 %v1230
        %v1232 = vpop.xlane.xlu0 %1231
        %v1234 = vrot.slane %v1232, 1
        %v1237 = vrcp.pop %v1232
        %v1238 = vmul.f32 %v1232, %v1237
        %v1239 = vsub.f32 1.0, %v1238
        %v1240 = vmul.f32 %v1237, %v1239
        %v1241 = vadd.f32 %v1237, %v1240
        %vm1242 = vweird.f32 %v1232
        %vm1243 = vweird.f32 %v1237
        %vm1244 = vmor %vm1242, %vm1243
        %v1245 = vsel %vm1244, %v1237, %v1241
        %v1246 = vand.u32 2147483647, %v1232
        %vm1247 = vcmp.eq.f32.partialorder %v1246, 8.507059e+37
        %v1248 = vand.u32 %v1232, 2147483648
        %v1249 = vor.u32 1.1754944e-38, %v1248
        %v1250 = vsel %vm1247, %v1249, %v1245
        %v1251 = vmul.f32 %v1222, %v1250
        %v1252 = vrcp.pop %v1234
        %v1253 = vmul.f32 %v1234, %v1252
        %v1254 = vsub.f32 1.0, %v1253
        %v1255 = vmul.f32 %v1252, %v1254
        %v1256 = vadd.f32 %v1252, %v1255
        %vm1257 = vweird.f32 %v1234
        %vm1258 = vweird.f32 %v1252
        %vm1259 = vmor %vm1257, %vm1258
        %v1260 = vsel %vm1259, %v1252, %v1256
        %v1261 = vand.u32 2147483647, %v1234
        %vm1262 = vcmp.eq.f32.partialorder %v1261, 8.507059e+37
        %v1263 = vand.u32 %v1234, 2147483648
        %v1264 = vor.u32 1.1754944e-38, %v1263
        %v1265 = vsel %vm1262, %v1264, %v1260
        %v1266 = vmul.f32 %v1224, %v1265
        %v1267 = vperm.slane %v1251, 0
        %v1268 = vperm.slane %v1266, 0
        %v1269 = vmul.f32 %v1267, %v1031
        %v1270 = vmul.f32 %v1267, %v1032
        %v1271 = vmul.f32 %v1268, %v1033
        %v1272 = vmul.f32 %v1268, %v1034
        %v1273 = vsel %vm280, %v1269, 0.0
        %1274 = vadd.xlane.f32.xlu0 %v1273
        %v1275 = vpop.xlane.xlu0 %1274
        %v1276 = vsel %vm280, %v1270, 0.0
        %1277 = vadd.xlane.f32.xlu0 %v1276
        %v1278 = vpop.xlane.xlu0 %1277
        %v1279 = vsel %vm280, %v1271, 0.0
        %1280 = vadd.xlane.f32.xlu0 %v1279
        %v1281 = vpop.xlane.xlu0 %1280
        %v1282 = vsel %vm280, %v1272, 0.0
        %1283 = vadd.xlane.f32.xlu0 %v1282
        %v1284 = vpop.xlane.xlu0 %1283
        %v1285 = vmul.f32 %v1275, %v1275
        %v1286 = vmul.f32 %v1278, %v1278
        %v1287 = vmul.f32 %v1281, %v1281
        %v1288 = vmul.f32 %v1284, %v1284
        %v1293 = vperm.slane %v1285, %v314
        %v1294 = vperm.slane %v1286, %v316
        %v1295 = vsel %vm318, %v1294, %v1293
        %v1296 = vperm.slane %v1287, %v314
        %v1297 = vperm.slane %v1288, %v316
        %v1298 = vsel %vm318, %v1297, %v1296
        %v1299 = vsel %vm323, %v1298, %v1295
        %v1301 = vsel %vm326, %v1299, 0.0
        %1302 = vadd.xlane.f32.xlu0 %v1301
        %v1303 = vpop.xlane.xlu0 %1302
        %v1305 = vperm.slane %v1303, 0
        %v1306 = vperm.slane %v1303, 1
        %v1309 = vmul.f32 %v1275, %v1305
        %v1310 = vmul.f32 %v1278, %v1305
        %v1311 = vmul.f32 %v1281, %v1306
        %v1312 = vmul.f32 %v1284, %v1306
        %v1313 = vadd.f32 %v1303, 1.0
        %v1315 = vperm.slane %v1313, 0
        %v1316 = vperm.slane %v1313, 1
        %v1319 = vrcp.pop %v1315
        %v1320 = vmul.f32 %v1315, %v1319
        %v1321 = vsub.f32 1.0, %v1320
        %v1322 = vmul.f32 %v1319, %v1321
        %v1323 = vadd.f32 %v1319, %v1322
        %vm1324 = vweird.f32 %v1315
        %vm1325 = vweird.f32 %v1319
        %vm1326 = vmor %vm1324, %vm1325
        %v1327 = vsel %vm1326, %v1319, %v1323
        %v1328 = vand.u32 2147483647, %v1315
        %vm1329 = vcmp.eq.f32.partialorder %v1328, 8.507059e+37
        %v1330 = vand.u32 %v1315, 2147483648
        %v1331 = vor.u32 1.1754944e-38, %v1330
        %v1332 = vsel %vm1329, %v1331, %v1327
        %v1333 = vmul.f32 %v1309, %v1332
        %v1334 = vmul.f32 %v1310, %v1332
        %v1335 = vrcp.pop %v1316
        %v1336 = vmul.f32 %v1316, %v1335
        %v1337 = vsub.f32 1.0, %v1336
        %v1338 = vmul.f32 %v1335, %v1337
        %v1339 = vadd.f32 %v1335, %v1338
        %vm1340 = vweird.f32 %v1316
        %vm1341 = vweird.f32 %v1335
        %vm1342 = vmor %vm1340, %vm1341
        %v1343 = vsel %vm1342, %v1335, %v1339
        %v1344 = vand.u32 2147483647, %v1316
        %vm1345 = vcmp.eq.f32.partialorder %v1344, 8.507059e+37
        %v1346 = vand.u32 %v1316, 2147483648
        %v1347 = vor.u32 1.1754944e-38, %v1346
        %v1348 = vsel %vm1345, %v1347, %v1343
        %v1349 = vmul.f32 %v1311, %v1348
        %v1350 = vmul.f32 %v1312, %v1348
        %v1351 = vrsqrt.pop %v1303
        %v1352 = vmul.f32 %v1351, %v1303
        %v1353 = vmul.f32 %v1352, %v1351
        %v1354 = vmul.f32 0.5, %v1353
        %v1355 = vsub.f32 1.5, %v1354
        %v1356 = vmul.f32 %v1351, %v1355
        %v1357 = vmul.f32 %v1303, %v1356
        %vm1358 = vcmp.eq.f32.partialorder %v1303, inf
        %v1359 = vsel %vm1358, %v1303, %v1357
        %vm1360 = vcmp.eq.f32.partialorder %v1303, 0.0
        %v1361 = vand.u32 %v1303, 2147483648
        %v1362 = vsel %vm1360, %v1361, %v1359
        %v1364 = vperm.slane %v1362, 0
        %v1365 = vperm.slane %v1362, 1
        %v1368 = vrcp.pop %v1364
        %v1369 = vmul.f32 %v1364, %v1368
        %v1370 = vsub.f32 1.0, %v1369
        %v1371 = vmul.f32 %v1368, %v1370
        %v1372 = vadd.f32 %v1368, %v1371
        %vm1373 = vweird.f32 %v1364
        %vm1374 = vweird.f32 %v1368
        %vm1375 = vmor %vm1373, %vm1374
        %v1376 = vsel %vm1375, %v1368, %v1372
        %v1377 = vand.u32 2147483647, %v1364
        %vm1378 = vcmp.eq.f32.partialorder %v1377, 8.507059e+37
        %v1379 = vand.u32 %v1364, 2147483648
        %v1380 = vor.u32 1.1754944e-38, %v1379
        %v1381 = vsel %vm1378, %v1380, %v1376
        %v1382 = vmul.f32 %v1333, %v1381
        %v1383 = vmul.f32 %v1334, %v1381
        %v1384 = vrcp.pop %v1365
        %v1385 = vmul.f32 %v1365, %v1384
        %v1386 = vsub.f32 1.0, %v1385
        %v1387 = vmul.f32 %v1384, %v1386
        %v1388 = vadd.f32 %v1384, %v1387
        %vm1389 = vweird.f32 %v1365
        %vm1390 = vweird.f32 %v1384
        %vm1391 = vmor %vm1389, %vm1390
        %v1392 = vsel %vm1391, %v1384, %v1388
        %v1393 = vand.u32 2147483647, %v1365
        %vm1394 = vcmp.eq.f32.partialorder %v1393, 8.507059e+37
        %v1395 = vand.u32 %v1365, 2147483648
        %v1396 = vor.u32 1.1754944e-38, %v1395
        %v1397 = vsel %vm1394, %v1396, %v1392
        %v1398 = vmul.f32 %v1349, %v1397
        %v1399 = vmul.f32 %v1350, %v1397
        %1401 = vset.pattern.permute.xlu0 0
        %1402 = vperm.xlu0 %1401, %v1382
        %v1403 = vpop.permute.xlu0 %1402
        %1406 = vset.pattern.permute.xlu0 0
        %1407 = vperm.xlu0 %1406, %v1383
        %v1408 = vpop.permute.xlu0 %1407
        %1411 = vset.pattern.permute.xlu0 0
        %1412 = vperm.xlu0 %1411, %v1398
        %v1413 = vpop.permute.xlu0 %1412
        %1416 = vset.pattern.permute.xlu0 0
        %1417 = vperm.xlu0 %1416, %v1399
        %v1418 = vpop.permute.xlu0 %1417
        %v1420 = vmul.f32 %v1031, %v1403
        %v1421 = vmul.f32 %v1032, %v1408
        %v1422 = vmul.f32 %v1033, %v1413
        %v1423 = vmul.f32 %v1034, %v1418
        %v1424 = vsel %vm280, %v1420, 0.0
        %v1425 = vsel %vm280, %v1421, 0.0
        %v1426 = vadd.f32 %v1424, %v1425
        %v1427 = vrot.slane %v1426, 4
        %v1428 = vadd.f32 %v1426, %v1427
        %v1429 = vrot.slane %v1428, 2
        %v1430 = vadd.f32 %v1428, %v1429
        %v1431 = vrot.slane %v1430, 1
        %v1432 = vadd.f32 %v1430, %v1431
        %v1433 = vsel %vm280, %v1422, 0.0
        %v1434 = vsel %vm280, %v1423, 0.0
        %v1435 = vadd.f32 %v1433, %v1434
        %v1436 = vrot.slane %v1435, 4
        %v1437 = vadd.f32 %v1435, %v1436
        %v1438 = vrot.slane %v1437, 2
        %v1439 = vadd.f32 %v1437, %v1438
        %v1440 = vrot.slane %v1439, 1
        %v1441 = vadd.f32 %v1439, %v1440
        %v1442 = vadd.f32 %v1198, %v1432
        %v1443 = vadd.f32 %v1207, %v1441
        %v1446 = vsel %vm323, %v1443, %v1442
        %v1448 = vsel %vm472, %v1446, -inf
        %1449 = vmax.xlane.f32.xlu0 %v1448
        %v1450 = vpop.xlane.xlu0 %1449
        %v1452 = vrot.slane %v1450, 1
        %v1455 = vsub.f32 %v1442, %v1450
        %v1456 = vsub.f32 %v1443, %v1452
        %v1457 = vmul.f32 %v1455, 1.442695
        %v1458 = vpow.pop %v1457
        %v1459 = vmul.f32 %v1456, 1.442695
        %v1460 = vpow.pop %v1459
        %v1463 = vrot.slane %v1460, 7
        %v1464 = vsel %vm323, %v1463, %v1458
        %v1466 = vsel %vm472, %v1464, 0.0
        %1467 = vadd.xlane.f32.xlu0 %v1466
        %v1468 = vpop.xlane.xlu0 %1467
        %v1470 = vrot.slane %v1468, 1
        %v1473 = vrcp.pop %v1468
        %v1474 = vmul.f32 %v1468, %v1473
        %v1475 = vsub.f32 1.0, %v1474
        %v1476 = vmul.f32 %v1473, %v1475
        %v1477 = vadd.f32 %v1473, %v1476
        %vm1478 = vweird.f32 %v1468
        %vm1479 = vweird.f32 %v1473
        %vm1480 = vmor %vm1478, %vm1479
        %v1481 = vsel %vm1480, %v1473, %v1477
        %v1482 = vand.u32 2147483647, %v1468
        %vm1483 = vcmp.eq.f32.partialorder %v1482, 8.507059e+37
        %v1484 = vand.u32 %v1468, 2147483648
        %v1485 = vor.u32 1.1754944e-38, %v1484
        %v1486 = vsel %vm1483, %v1485, %v1481
        %v1487 = vmul.f32 %v1458, %v1486
        %v1488 = vrcp.pop %v1470
        %v1489 = vmul.f32 %v1470, %v1488
        %v1490 = vsub.f32 1.0, %v1489
        %v1491 = vmul.f32 %v1488, %v1490
        %v1492 = vadd.f32 %v1488, %v1491
        %vm1493 = vweird.f32 %v1470
        %vm1494 = vweird.f32 %v1488
        %vm1495 = vmor %vm1493, %vm1494
        %v1496 = vsel %vm1495, %v1488, %v1492
        %v1497 = vand.u32 2147483647, %v1470
        %vm1498 = vcmp.eq.f32.partialorder %v1497, 8.507059e+37
        %v1499 = vand.u32 %v1470, 2147483648
        %v1500 = vor.u32 1.1754944e-38, %v1499
        %v1501 = vsel %vm1498, %v1500, %v1496
        %v1502 = vmul.f32 %v1460, %v1501
        %v1503 = vperm.slane %v1487, 0
        %v1504 = vperm.slane %v1502, 0
        %v1505 = vmul.f32 %v1503, %v1031
        %v1506 = vmul.f32 %v1503, %v1032
        %v1507 = vmul.f32 %v1504, %v1033
        %v1508 = vmul.f32 %v1504, %v1034
        %v1509 = vsel %vm280, %v1505, 0.0
        %1510 = vadd.xlane.f32.xlu0 %v1509
        %v1511 = vpop.xlane.xlu0 %1510
        %v1512 = vsel %vm280, %v1506, 0.0
        %1513 = vadd.xlane.f32.xlu0 %v1512
        %v1514 = vpop.xlane.xlu0 %1513
        %v1515 = vsel %vm280, %v1507, 0.0
        %1516 = vadd.xlane.f32.xlu0 %v1515
        %v1517 = vpop.xlane.xlu0 %1516
        %v1518 = vsel %vm280, %v1508, 0.0
        %1519 = vadd.xlane.f32.xlu0 %v1518
        %v1520 = vpop.xlane.xlu0 %1519
        %v1521 = vmul.f32 %v1511, %v1511
        %v1522 = vmul.f32 %v1514, %v1514
        %v1523 = vmul.f32 %v1517, %v1517
        %v1524 = vmul.f32 %v1520, %v1520
        %v1529 = vperm.slane %v1521, %v314
        %v1530 = vperm.slane %v1522, %v316
        %v1531 = vsel %vm318, %v1530, %v1529
        %v1532 = vperm.slane %v1523, %v314
        %v1533 = vperm.slane %v1524, %v316
        %v1534 = vsel %vm318, %v1533, %v1532
        %v1535 = vsel %vm323, %v1534, %v1531
        %v1537 = vsel %vm326, %v1535, 0.0
        %1538 = vadd.xlane.f32.xlu0 %v1537
        %v1539 = vpop.xlane.xlu0 %1538
        %v1541 = vperm.slane %v1539, 0
        %v1542 = vperm.slane %v1539, 1
        %v1545 = vmul.f32 %v1511, %v1541
        %v1546 = vmul.f32 %v1514, %v1541
        %v1547 = vmul.f32 %v1517, %v1542
        %v1548 = vmul.f32 %v1520, %v1542
        %v1549 = vadd.f32 %v1539, 1.0
        %v1551 = vperm.slane %v1549, 0
        %v1552 = vperm.slane %v1549, 1
        %v1555 = vrcp.pop %v1551
        %v1556 = vmul.f32 %v1551, %v1555
        %v1557 = vsub.f32 1.0, %v1556
        %v1558 = vmul.f32 %v1555, %v1557
        %v1559 = vadd.f32 %v1555, %v1558
        %vm1560 = vweird.f32 %v1551
        %vm1561 = vweird.f32 %v1555
        %vm1562 = vmor %vm1560, %vm1561
        %v1563 = vsel %vm1562, %v1555, %v1559
        %v1564 = vand.u32 2147483647, %v1551
        %vm1565 = vcmp.eq.f32.partialorder %v1564, 8.507059e+37
        %v1566 = vand.u32 %v1551, 2147483648
        %v1567 = vor.u32 1.1754944e-38, %v1566
        %v1568 = vsel %vm1565, %v1567, %v1563
        %v1569 = vmul.f32 %v1545, %v1568
        %v1570 = vmul.f32 %v1546, %v1568
        %v1571 = vrcp.pop %v1552
        %v1572 = vmul.f32 %v1552, %v1571
        %v1573 = vsub.f32 1.0, %v1572
        %v1574 = vmul.f32 %v1571, %v1573
        %v1575 = vadd.f32 %v1571, %v1574
        %vm1576 = vweird.f32 %v1552
        %vm1577 = vweird.f32 %v1571
        %vm1578 = vmor %vm1576, %vm1577
        %v1579 = vsel %vm1578, %v1571, %v1575
        %v1580 = vand.u32 2147483647, %v1552
        %vm1581 = vcmp.eq.f32.partialorder %v1580, 8.507059e+37
        %v1582 = vand.u32 %v1552, 2147483648
        %v1583 = vor.u32 1.1754944e-38, %v1582
        %v1584 = vsel %vm1581, %v1583, %v1579
        %v1585 = vmul.f32 %v1547, %v1584
        %v1586 = vmul.f32 %v1548, %v1584
        %v1587 = vrsqrt.pop %v1539
        %v1588 = vmul.f32 %v1587, %v1539
        %v1589 = vmul.f32 %v1588, %v1587
        %v1590 = vmul.f32 0.5, %v1589
        %v1591 = vsub.f32 1.5, %v1590
        %v1592 = vmul.f32 %v1587, %v1591
        %v1593 = vmul.f32 %v1539, %v1592
        %vm1594 = vcmp.eq.f32.partialorder %v1539, inf
        %v1595 = vsel %vm1594, %v1539, %v1593
        %vm1596 = vcmp.eq.f32.partialorder %v1539, 0.0
        %v1597 = vand.u32 %v1539, 2147483648
        %v1598 = vsel %vm1596, %v1597, %v1595
        %v1600 = vperm.slane %v1598, 0
        %v1601 = vperm.slane %v1598, 1
        %v1604 = vrcp.pop %v1600
        %v1605 = vmul.f32 %v1600, %v1604
        %v1606 = vsub.f32 1.0, %v1605
        %v1607 = vmul.f32 %v1604, %v1606
        %v1608 = vadd.f32 %v1604, %v1607
        %vm1609 = vweird.f32 %v1600
        %vm1610 = vweird.f32 %v1604
        %vm1611 = vmor %vm1609, %vm1610
        %v1612 = vsel %vm1611, %v1604, %v1608
        %v1613 = vand.u32 2147483647, %v1600
        %vm1614 = vcmp.eq.f32.partialorder %v1613, 8.507059e+37
        %v1615 = vand.u32 %v1600, 2147483648
        %v1616 = vor.u32 1.1754944e-38, %v1615
        %v1617 = vsel %vm1614, %v1616, %v1612
        %v1618 = vmul.f32 %v1569, %v1617
        %v1619 = vmul.f32 %v1570, %v1617
        %v1620 = vrcp.pop %v1601
        %v1621 = vmul.f32 %v1601, %v1620
        %v1622 = vsub.f32 1.0, %v1621
        %v1623 = vmul.f32 %v1620, %v1622
        %v1624 = vadd.f32 %v1620, %v1623
        %vm1625 = vweird.f32 %v1601
        %vm1626 = vweird.f32 %v1620
        %vm1627 = vmor %vm1625, %vm1626
        %v1628 = vsel %vm1627, %v1620, %v1624
        %v1629 = vand.u32 2147483647, %v1601
        %vm1630 = vcmp.eq.f32.partialorder %v1629, 8.507059e+37
        %v1631 = vand.u32 %v1601, 2147483648
        %v1632 = vor.u32 1.1754944e-38, %v1631
        %v1633 = vsel %vm1630, %v1632, %v1628
        %v1634 = vmul.f32 %v1585, %v1633
        %v1635 = vmul.f32 %v1586, %v1633
        %vm1636 = vcmp.ge.f32.partialorder %v1618, 0.0
        %vm1637 = vcmp.ge.f32.partialorder %v1619, 0.0
        %vm1638 = vcmp.ge.f32.partialorder %v1634, 0.0
        %vm1639 = vcmp.ge.f32.partialorder %v1635, 0.0
        %v1640 = vmul.f32 %v1618, 0.05
        %v1641 = vmul.f32 %v1619, 0.05
        %v1642 = vmul.f32 %v1634, 0.05
        %v1643 = vmul.f32 %v1635, 0.05
        %v1644 = vsel %vm1636, %v1618, %v1640
        %v1645 = vsel %vm1637, %v1619, %v1641
        %v1646 = vsel %vm1638, %v1634, %v1642
        %v1647 = vsel %vm1639, %v1635, %v1643
        %v1648 = vsub.f32 %v1618, 1.0
        %v1649 = vsub.f32 %v1619, 1.0
        %v1650 = vsub.f32 %v1634, 1.0
        %v1651 = vsub.f32 %v1635, 1.0
        %v1652 = vmax.f32 %v1648, 0.0
        %v1653 = vmax.f32 %v1649, 0.0
        %v1654 = vmax.f32 %v1650, 0.0
        %v1655 = vmax.f32 %v1651, 0.0
        %v1656 = vmul.f32 %v1652, 0.95
        %v1657 = vmul.f32 %v1653, 0.95
        %v1658 = vmul.f32 %v1654, 0.95
        %v1659 = vmul.f32 %v1655, 0.95
        %v1660 = vsub.f32 %v1644, %v1656
        %v1661 = vsub.f32 %v1645, %v1657
        %v1662 = vsub.f32 %v1646, %v1658
        %v1663 = vsub.f32 %v1647, %v1659
        %1668 = vset.pattern.permute.xlu0 0
        %1669 = vperm.xlu0 %1668, %v1660
        %v1670 = vpop.permute.xlu0 %1669
        %1671 = vset.pattern.permute.xlu0 0
        %1672 = vperm.xlu0 %1671, %v1661
        %v1673 = vpop.permute.xlu0 %1672
        %1674 = vset.pattern.permute.xlu0 0
        %1675 = vperm.xlu0 %1674, %v1662
        %v1676 = vpop.permute.xlu0 %1675
        %1677 = vset.pattern.permute.xlu0 0
        %1678 = vperm.xlu0 %1677, %v1663
        %v1679 = vpop.permute.xlu0 %1678
        %v1680 = vperm.slane %v1670, %v314
        %v1681 = vperm.slane %v1673, %v316
        %v1682 = vsel %vm318, %v1681, %v1680
        %v1683 = vperm.slane %v1676, %v314
        %v1684 = vperm.slane %v1679, %v316
        %v1685 = vsel %vm318, %v1684, %v1683
        %v1686 = vsel %vm323, %v1685, %v1682
        %s1688 = scalar_lea.vmem %s184, 2
        %1689 = vst.msk [vmem:[%s1688] sm:$0x3] %vm326, %v1686
        %s1690 = smul.u32 2, %s17
        %p1691 = scmp.lt.s32.totalorder %s1690, 3
        %s1692 = scalar_select %p1691, %s1690, 3
        %s1693 = smul.addr %s1692, 2
        %s1694 = scalar_lea.vmem %s2, %s1693
        // Predicated region
        $region37: #{classifier_caps_forward.1} parent=27 // pred_check
          %p1695 = pneg %p82
        $region38: #{classifier_caps_forward.1} parent=27 // pred_check_branch
          %1697 = sbr.rel (%p1695) target = $region40
        $region39: #{classifier_caps_forward.1} parent=27 // pred_region
          %s1698 = smul.u32 2, %s17
        $region40: #{classifier_caps_forward.1} parent=27 // pred_fallthru
          _
      $region28: #{classifier_caps_forward.1} parent=5 // pred_fallthru
        _
      %p1699 = scmp.le.s32.totalorder 2, %s12
      // Predicated region
      $region41: #{classifier_caps_forward.1} parent=5 // pred_check
        %p1700 = pneg %p1699
      $region42: #{classifier_caps_forward.1} parent=5 // pred_check_branch
        %1702 = sbr.rel (%p1700) target = $region44
      $region43: #{classifier_caps_forward.1} parent=5 // pred_region
        %s1703 = ssub.s32 %s12, 2
        // Predicated region
        $region45: #{classifier_caps_forward.1} parent=43 // pred_check
          %p1704 = pneg %p88
        $region46: #{classifier_caps_forward.1} parent=43 // pred_check_branch
          %1706 = sbr.rel (%p1704) target = $region48
        $region47: #{classifier_caps_forward.1} parent=43 // pred_region
          %s1707 = smul.u32 2, %s18
          %p1708 = scmp.lt.s32.totalorder %s1707, 3
          %s1709 = scalar_select %p1708, %s1707, 3
          %s1710 = smul.addr %s1709, 2
          %s1711 = scalar_lea.vmem %s2, %s1710
        $region48: #{classifier_caps_forward.1} parent=43 // pred_fallthru
          _
      $region44: #{classifier_caps_forward.1} parent=5 // pred_fallthru
        _
    $region6: #{classifier_caps_forward.1} parent=1 // loop_footer
      %s16 = sadd.s32 1, %s12
    $region7: #{classifier_caps_forward.1} parent=1 // loop_footer_branch
      %11 = sbr.rel target = $region3
    $region8: #{classifier_caps_forward.1} parent=1 // loop_exit
      _
    %1712 = vsyncpa [#allocation4], 1
    %s1713 = scalar_lea.sflag [#allocation4], 1
    %1714 = vsyncpa %s1713, 1
    %1715 = vsyncpa [#allocation6], 1
    %s1716 = scalar_lea.sflag [#allocation6], 1
    %1717 = vsyncpa %s1716, 1

</llo_original>
